<compile_context>
chip_gen: v6e
topology: v6e:2x2x1
jax: 0.10.0
libtpu: 0.0.40
codegen_flags: <defaults>
</compile_context>

<pallas_src>
import math
import functools

import jax
import jax.numpy as jnp
from jax.experimental import pallas as pl
from jax.experimental.pallas import tpu as pltpu

NEG_INF = -1e30  # stand-in for -inf (diagonal is unmasked, so no all-masked rows)


def _layernorm(x, w, b, eps=1e-5):
    mu = jnp.mean(x, axis=-1, keepdims=True)
    var = jnp.mean((x - mu) ** 2, axis=-1, keepdims=True)
    return (x - mu) * jax.lax.rsqrt(var + eps) * w + b


# --------------------------- prologue kernel (GLU) ---------------------------
def glu_kernel(xin_ref, wglu_ref, bglu_ref, out_ref, *, d_model):
    # xin: [rows, D] f32, wglu: [D, 2D] bf16  -> GLU(dim=-1): [rows, D] f32
    z = jnp.dot(xin_ref[...].astype(jnp.bfloat16), wglu_ref[...],
                preferred_element_type=jnp.float32) + bglu_ref[...]
    a = z[:, :d_model]
    g = z[:, d_model:]
    out_ref[...] = a * (1.0 / (1.0 + jnp.exp(-g)))


# --------------------------- fused encoder kernel ----------------------------
def layer_kernel(x0_ref, wqkv_ref, wo_ref, w1_ref, w2_ref, vec_ref,
                 out_ref, x_ref, mask_ref, *, d_model, nhead, dff, seq, tb):
    # grid = (batch_tile bt [parallel], layer l [arbitrary]).
    # Activations are 2-D [rows, D] with rows = tb*seq (batch folded into M).
    D = d_model
    Dh = D // nhead
    rows = tb * seq
    l = pl.program_id(1)
    L = pl.num_programs(1)

    # ---- per-batch-tile prologue: load layer-0 input, build causal mask ----
    @pl.when(l == 0)
    def _():
        x_ref[...] = x0_ref[...]
        r = jax.lax.broadcasted_iota(jnp.int32, (seq, seq), 0)
        c = jax.lax.broadcasted_iota(jnp.int32, (seq, seq), 1)
        mask_ref[...] = jnp.where(c > r, NEG_INF, 0.0).astype(jnp.float32)

    # ---- unpack the single packed per-layer vector block (one DMA) ----
    bqkv = vec_ref[0:1, :3 * D]
    bo = vec_ref[1:2, :D]
    n1w = vec_ref[2:3, :D]
    n1b = vec_ref[3:4, :D]
    n2w = vec_ref[4:5, :D]
    n2b = vec_ref[5:6, :D]
    b1 = vec_ref[6:7, :dff]
    b2 = vec_ref[7:8, :D]

    x = x_ref[...]                         # resident activation [rows, D] f32
    mask = mask_ref[...][None]             # [1, S, S]

    # ---- self-attention sub-block (pre-norm) ----
    h = _layernorm(x, n1w, n1b)
    qkv = jnp.dot(h.astype(jnp.bfloat16), wqkv_ref[...],
                  preferred_element_type=jnp.float32) + bqkv    # [rows, 3D] f32
    scale = 1.0 / math.sqrt(Dh)

    attn = jnp.zeros((rows, D), jnp.float32)
    for hh in range(nhead):                # static unroll over heads
        lo = hh * Dh
        q = qkv[:, lo:lo + Dh].reshape(tb, seq, Dh) * scale
        k = qkv[:, D + lo:D + lo + Dh].reshape(tb, seq, Dh)
        v = qkv[:, 2 * D + lo:2 * D + lo + Dh].reshape(tb, seq, Dh)
        s = jnp.einsum('bqd,bkd->bqk', q, k,
                       preferred_element_type=jnp.float32) + mask   # [tb,S,S]
        s = s - jnp.max(s, axis=-1, keepdims=True)
        p = jnp.exp(s)
        p = p / jnp.sum(p, axis=-1, keepdims=True)          # exact softmax
        o = jnp.einsum('bqk,bkd->bqd', p, v,
                       preferred_element_type=jnp.float32)          # [tb,S,Dh]
        # Accumulate through the hh-th row-block of the output projection:
        # avoids the concatenate / long live-ranges of a per-head list.
        attn = attn + jnp.dot(o.reshape(rows, Dh).astype(jnp.bfloat16),
                              wo_ref[lo:lo + Dh, :],
                              preferred_element_type=jnp.float32)
    x = x + attn + bo

    # ---- feed-forward sub-block (pre-norm) ----
    h = _layernorm(x, n2w, n2b)
    f = jnp.dot(h.astype(jnp.bfloat16), w1_ref[...],
                preferred_element_type=jnp.float32) + b1
    f = jnp.maximum(f, 0.0)                                  # ReLU
    f = jnp.dot(f.astype(jnp.bfloat16), w2_ref[...],
                preferred_element_type=jnp.float32) + b2
    x = x + f

    # ---- epilogue: keep resident except on the last layer, which writes out ----
    @pl.when(l < L - 1)
    def _():
        x_ref[...] = x

    @pl.when(l == L - 1)
    def _():
        out_ref[...] = x


# --------------------------------- wrapper -----------------------------------
def _pick_tb(batch, seq, target_rows=256, max_rows=1024):
    """Batch-tile size: divisor of batch, rows multiple of 8 (or full batch),
    aiming for TB*S >= target_rows while keeping the VMEM tile bounded."""
    valid = [tb for tb in range(1, batch + 1)
             if batch % tb == 0 and ((tb * seq) % 8 == 0 or tb == batch)]
    capped = [tb for tb in valid if tb * seq <= max(max_rows, seq)] or valid
    reach = [tb for tb in capped if tb * seq >= target_rows]
    return min(reach) if reach else max(capped)


def encoder_forward(src, params, *, nhead):
    """src: int32 [S, B] (seq-first, like the PyTorch module). Returns f32 [S, B, D]."""
    S, B = src.shape
    D = params['embedding'].shape[1]
    L = params['wqkv_t'].shape[0]
    dff = params['w1_t'].shape[2]
    Wmax = params['vec'].shape[2]

    TB = _pick_tb(B, S)
    rows = TB * S
    nbt = B // TB

    # Embedding gather + scale + positional encoding in the wrapper (cheap,
    # data-dependent gather is not expressible as a BlockSpec).
    emb = jnp.take(params['embedding'], src.T, axis=0).astype(jnp.float32)   # [B,S,D]
    xin = (emb * math.sqrt(D) + params['pe'][:S][None]).reshape(B * S, D)

    # ---- prologue: GLU(Linear) over the full [B*S, D] activation ----
    x0 = pl.pallas_call(
        functools.partial(glu_kernel, d_model=D),
        out_shape=jax.ShapeDtypeStruct((B * S, D), jnp.float32),
        grid_spec=pltpu.PrefetchScalarGridSpec(
            num_scalar_prefetch=0,
            grid=(nbt,),
            in_specs=[pl.BlockSpec((rows, D), lambda i: (i, 0)),
                      pl.BlockSpec((D, 2 * D), lambda i: (0, 0)),
                      pl.BlockSpec((1, 2 * D), lambda i: (0, 0))],
            out_specs=pl.BlockSpec((rows, D), lambda i: (i, 0)),
        ),
        compiler_params=pltpu.CompilerParams(dimension_semantics=("parallel",)),
    )(xin, params['wglu_t'], params['bglu'])

    # Explicit VMEM budget: double-buffered bf16 per-layer weight tiles +
    # in/out activation blocks + resident scratch (+50% headroom).
    bf16_b, f32_b = 2, 4
    w_layer = (D * 3 * D + D * D + 2 * D * dff) * bf16_b + 8 * Wmax * f32_b
    act = rows * D * f32_b
    vmem_limit = int(1.5 * (2 * w_layer + 5 * act + S * S * f32_b)) + (4 << 20)
    vmem_limit = max(32 << 20, min(vmem_limit, 100 << 20))  # re-budget <=~48MiB on v7x

    def act_spec():      # activation block: batch tile bt, constant across layers
        return pl.BlockSpec((rows, D), lambda bt, l: (bt, 0))

    def per_layer(*tail):  # leading layer dim squeezed, indexed by l
        return pl.BlockSpec((None,) + tail, lambda bt, l: (l,) + (0,) * len(tail))

    out = pl.pallas_call(
        functools.partial(layer_kernel, d_model=D, nhead=nhead, dff=dff,
                          seq=S, tb=TB),
        out_shape=jax.ShapeDtypeStruct((B * S, D), jnp.float32),
        grid_spec=pltpu.PrefetchScalarGridSpec(
            num_scalar_prefetch=0,
            grid=(nbt, L),
            in_specs=[
                act_spec(),                         # x0     [B*S, D]    f32
                per_layer(D, 3 * D),                # wqkv_t [L, D, 3D]  bf16
                per_layer(D, D),                    # wo_t   [L, D, D]   bf16
                per_layer(D, dff),                  # w1_t   [L, D, dff] bf16
                per_layer(dff, D),                  # w2_t   [L, dff, D] bf16
                per_layer(8, Wmax),                 # vec    [L, 8, Wmax] f32 (8 packed vectors)
            ],
            out_specs=act_spec(),
            scratch_shapes=[pltpu.VMEM((rows, D), jnp.float32),   # resident activation
                            pltpu.VMEM((S, S), jnp.float32)],     # causal mask
        ),
        compiler_params=pltpu.CompilerParams(
            dimension_semantics=("parallel", "arbitrary"),
            vmem_limit_bytes=vmem_limit),
    )(x0, params['wqkv_t'], params['wo_t'], params['w1_t'], params['w2_t'],
      params['vec'])

    # Back to the PyTorch seq-first [S, B, D] interface.
    return out.reshape(B, S, D).transpose(1, 0, 2)


# ------------------------------ parameter init --------------------------------
def init_params(key, *, num_layers, d_model, nhead, dff, ntokens, max_len=64):
    keys = jax.random.split(key, 2 + num_layers)

    # nn.Embedding(ntokens, d_model, padding_idx=0): N(0,1), row 0 zeroed
    emb = jax.random.normal(keys[0], (ntokens, d_model), jnp.float32)
    emb = emb.at[0].set(0.0)

    # sinusoidal positional encoding table (same formula as PositionalEncoding)
    position = jnp.arange(max_len, dtype=jnp.float32)[:, None]
    div_term = jnp.exp(jnp.arange(0, d_model, 2, dtype=jnp.float32)
                       * (-math.log(10000.0) / d_model))
    pe = jnp.zeros((max_len, d_model), jnp.float32)
    pe = pe.at[:, 0::2].set(jnp.sin(position * div_term))
    pe = pe.at[:, 1::2].set(jnp.cos(position * div_term))

    def linear(k, in_f, out_f):
        k1, k2 = jax.random.split(k)
        bound = 1.0 / math.sqrt(in_f)
        w = jax.random.uniform(k1, (out_f, in_f), jnp.float32, -bound, bound)
        b = jax.random.uniform(k2, (out_f,), jnp.float32, -bound, bound)
        return w.T, b[None, :]        # pre-transposed weight [in, out], bias [1, out]

    wglu_t, bglu = linear(keys[1], d_model, 2 * d_model)

    Wmax = max(3 * d_model, dff)

    def pad_row(v):                   # [1, w] -> [1, Wmax]
        return jnp.pad(v, ((0, 0), (0, Wmax - v.shape[1])))

    wqkv_s, wo_s, w1_s, w2_s, vec_s = [], [], [], [], []
    for li in range(num_layers):
        lk = jax.random.split(keys[2 + li], 6)
        wq_t, bq = linear(lk[0], d_model, d_model)
        wk_t, bk = linear(lk[1], d_model, d_model)
        wv_t, bv = linear(lk[2], d_model, d_model)
        wo_t, bo = linear(lk[3], d_model, d_model)
        w1_t, b1 = linear(lk[4], d_model, dff)
        w2_t, b2 = linear(lk[5], dff, d_model)
        wqkv_s.append(jnp.concatenate([wq_t, wk_t, wv_t], axis=1))   # [D, 3D]
        wo_s.append(wo_t)
        w1_s.append(w1_t)
        w2_s.append(w2_t)
        ones = jnp.ones((1, d_model), jnp.float32)
        zeros = jnp.zeros((1, d_model), jnp.float32)
        # packed per-layer vectors: [bqkv, bo, n1w, n1b, n2w, n2b, b1, b2]
        vec_s.append(jnp.concatenate(
            [pad_row(jnp.concatenate([bq, bk, bv], axis=1)),
             pad_row(bo), pad_row(ones), pad_row(zeros),
             pad_row(ones), pad_row(zeros),
             pad_row(b1), pad_row(b2)], axis=0))                     # [8, Wmax]

    return dict(
        embedding=emb, pe=pe,
        wglu_t=wglu_t.astype(jnp.bfloat16), bglu=bglu,
        wqkv_t=jnp.stack(wqkv_s).astype(jnp.bfloat16),
        wo_t=jnp.stack(wo_s).astype(jnp.bfloat16),
        w1_t=jnp.stack(w1_s).astype(jnp.bfloat16),
        w2_t=jnp.stack(w2_s).astype(jnp.bfloat16),
        vec=jnp.stack(vec_s),
    )


if __name__ == "__main__":
    num_layers, d_model, nhead, dff, ntokens = 2, 32, 2, 64, 50
    S, B = 8, 2

    key = jax.random.PRNGKey(0)
    pkey, skey = jax.random.split(key)
    params = init_params(pkey, num_layers=num_layers, d_model=d_model,
                         nhead=nhead, dff=dff, ntokens=ntokens, max_len=64)
    src = jax.random.randint(skey, (S, B), 0, ntokens, dtype=jnp.int32)

    fwd = jax.jit(functools.partial(encoder_forward, nhead=nhead))
    out = jax.block_until_ready(fwd(src, params))

    assert out.shape == (S, B, d_model), out.shape
    assert bool(jnp.all(jnp.isfinite(out)))
    # TODO(synk): dropout (p=0.5) omitted — matches eval/inference mode only.
    print("KERNEL_OK")
</pallas_src>

<mosaic_0001>
module attributes {stable_mosaic.version = 11 : i64} {
  func.func @glu_kernel(%arg0: i32, %arg1: memref<16x32xf32, #tpu.memory_space<vmem>>, %arg2: memref<32x64xbf16, #tpu.memory_space<vmem>>, %arg3: memref<1x64xf32, #tpu.memory_space<vmem>>, %arg4: memref<16x32xf32, #tpu.memory_space<vmem>>) attributes {dimension_semantics = [#tpu.dimension_semantics<parallel>], iteration_bounds = array<i64: 1>, scalar_prefetch = 0 : i64, scratch_operands = 0 : i64, tpu.core_type = #tpu.core_type<tc>, window_params = [{transform_indices = @transform_0, window_bounds = array<i64: 16, 32>}, {pipeline_mode = #tpu.pipeline_mode<synchronous>, transform_indices = @transform_1, window_bounds = array<i64: 32, 64>}, {pipeline_mode = #tpu.pipeline_mode<synchronous>, transform_indices = @transform_2, window_bounds = array<i64: 1, 64>}, {transform_indices = @transform_3, window_bounds = array<i64: 16, 32>}]} {
    %c0 = arith.constant 0 : index
    %c0_0 = arith.constant 0 : index
    %0 = vector.load %arg1[%c0, %c0_0] : memref<16x32xf32, #tpu.memory_space<vmem>>, vector<16x32xf32>
    %1 = arith.truncf %0 : vector<16x32xf32> to vector<16x32xbf16>
    %c0_1 = arith.constant 0 : index
    %c0_2 = arith.constant 0 : index
    %2 = vector.load %arg2[%c0_1, %c0_2] : memref<32x64xbf16, #tpu.memory_space<vmem>>, vector<32x64xbf16>
    %cst = arith.constant dense<0.000000e+00> : vector<16x64xf32>
    %3 = tpu.matmul %1, %2, %cst {dimension_numbers = #tpu.dot_dimension_numbers<[1], [0], [0], [1], [0, 0, 1, 1], [], []>} : vector<16x32xbf16>, vector<32x64xbf16>, vector<16x64xf32> -> vector<16x64xf32>
    %c0_3 = arith.constant 0 : index
    %c0_4 = arith.constant 0 : index
    %4 = vector.load %arg3[%c0_3, %c0_4] : memref<1x64xf32, #tpu.memory_space<vmem>>, vector<1x64xf32>
    %5 = vector.broadcast %4 : vector<1x64xf32> to vector<16x64xf32>
    %6 = arith.addf %3, %5 : vector<16x64xf32>
    %7 = vector.extract_strided_slice %6 {offsets = [0, 0], sizes = [16, 32], strides = [1, 1]} : vector<16x64xf32> to vector<16x32xf32>
    %8 = vector.extract_strided_slice %6 {offsets = [0, 32], sizes = [16, 32], strides = [1, 1]} : vector<16x64xf32> to vector<16x32xf32>
    %cst_5 = arith.constant 0.000000e+00 : f32
    %9 = vector.broadcast %cst_5 : f32 to vector<16x32xf32>
    %10 = arith.subf %9, %8 : vector<16x32xf32>
    %11 = math.exp %10 : vector<16x32xf32>
    %cst_6 = arith.constant 1.000000e+00 : f32
    %12 = vector.broadcast %cst_6 : f32 to vector<16x32xf32>
    %13 = arith.addf %12, %11 : vector<16x32xf32>
    %cst_7 = arith.constant 1.000000e+00 : f32
    %14 = vector.broadcast %cst_7 : f32 to vector<16x32xf32>
    %15 = arith.divf %14, %13 : vector<16x32xf32>
    %16 = arith.mulf %7, %15 : vector<16x32xf32>
    %c0_8 = arith.constant 0 : index
    %c0_9 = arith.constant 0 : index
    %17 = vector.load %arg4[%c0_8, %c0_9] : memref<16x32xf32, #tpu.memory_space<vmem>>, vector<16x32xf32>
    tpu.vector_store %arg4[%c0_8, %c0_9], %16 {strides = array<i32>} : memref<16x32xf32, #tpu.memory_space<vmem>>, vector<16x32xf32>,
    return
  }
  func.func @transform_0(%arg0: i32) -> (i32, i32) {
    %c0_i32 = arith.constant 0 : i32
    %c0_i32_0 = arith.constant 0 : i32
    return %arg0, %c0_i32 : i32, i32
  }
  func.func @transform_1(%arg0: i32) -> (i32, i32) {
    %c0_i32 = arith.constant 0 : i32
    %c0_i32_0 = arith.constant 0 : i32
    %c0_i32_1 = arith.constant 0 : i32
    return %c0_i32, %c0_i32_0 : i32, i32
  }
  func.func @transform_2(%arg0: i32) -> (i32, i32) {
    %c0_i32 = arith.constant 0 : i32
    %c0_i32_0 = arith.constant 0 : i32
    %c0_i32_1 = arith.constant 0 : i32
    return %c0_i32, %c0_i32_0 : i32, i32
  }
  func.func @transform_3(%arg0: i32) -> (i32, i32) {
    %c0_i32 = arith.constant 0 : i32
    %c0_i32_0 = arith.constant 0 : i32
    return %arg0, %c0_i32 : i32, i32
  }
}

module attributes {stable_mosaic.version = 11 : i64} {
  func.func @layer_kernel(%arg0: i32, %arg1: i32, %arg2: memref<16x32xf32, #tpu.memory_space<vmem>>, %arg3: memref<1x32x96xbf16, #tpu.memory_space<vmem>>, %arg4: memref<1x32x32xbf16, #tpu.memory_space<vmem>>, %arg5: memref<1x32x64xbf16, #tpu.memory_space<vmem>>, %arg6: memref<1x64x32xbf16, #tpu.memory_space<vmem>>, %arg7: memref<1x8x96xf32, #tpu.memory_space<vmem>>, %arg8: memref<16x32xf32, #tpu.memory_space<vmem>>, %arg9: memref<16x32xf32, #tpu.memory_space<vmem>>, %arg10: memref<8x8xf32, #tpu.memory_space<vmem>>) attributes {dimension_semantics = [#tpu.dimension_semantics<parallel>, #tpu.dimension_semantics<arbitrary>], iteration_bounds = array<i64: 1, 2>, scalar_prefetch = 0 : i64, scratch_operands = 2 : i64, tpu.core_type = #tpu.core_type<tc>, window_params = [{transform_indices = @transform_0, window_bounds = array<i64: 16, 32>}, {transform_indices = @transform_1, window_bounds = array<i64: 1, 32, 96>}, {transform_indices = @transform_2, window_bounds = array<i64: 1, 32, 32>}, {transform_indices = @transform_3, window_bounds = array<i64: 1, 32, 64>}, {transform_indices = @transform_4, window_bounds = array<i64: 1, 64, 32>}, {transform_indices = @transform_5, window_bounds = array<i64: 1, 8, 96>}, {transform_indices = @transform_6, window_bounds = array<i64: 16, 32>}]} {
    %c0_i32 = arith.constant 0 : i32
    %0 = arith.cmpi eq, %arg1, %c0_i32 : i32
    %1 = arith.extui %0 : i1 to i32
    %c0_i32_0 = arith.constant 0 : i32
    %2 = arith.cmpi ne, %1, %c0_i32_0 : i32
    scf.if %2 {
      %c0_64 = arith.constant 0 : index
      %c0_65 = arith.constant 0 : index
      %151 = vector.load %arg2[%c0_64, %c0_65] : memref<16x32xf32, #tpu.memory_space<vmem>>, vector<16x32xf32>
      %c0_66 = arith.constant 0 : index
      %c0_67 = arith.constant 0 : index
      %152 = vector.load %arg9[%c0_66, %c0_67] : memref<16x32xf32, #tpu.memory_space<vmem>>, vector<16x32xf32>
      tpu.vector_store %arg9[%c0_66, %c0_67], %151 {strides = array<i32>} : memref<16x32xf32, #tpu.memory_space<vmem>>, vector<16x32xf32>,
      %153 = tpu.iota {dimensions = array<i32: 0>} : vector<8x8xi32>
      %154 = tpu.iota {dimensions = array<i32: 1>} : vector<8x8xi32>
      %155 = arith.cmpi sgt, %154, %153 : vector<8x8xi32>
      %cst_68 = arith.constant -1.000000e+30 : f32
      %cst_69 = arith.constant 0.000000e+00 : f32
      %156 = vector.broadcast %cst_68 : f32 to vector<8x8xf32>
      %157 = vector.broadcast %cst_69 : f32 to vector<8x8xf32>
      %158 = arith.select %155, %156, %157 : vector<8x8xi1>, vector<8x8xf32>
      %c0_70 = arith.constant 0 : index
      %c0_71 = arith.constant 0 : index
      %159 = vector.load %arg10[%c0_70, %c0_71] : memref<8x8xf32, #tpu.memory_space<vmem>>, vector<8x8xf32>
      tpu.vector_store %arg10[%c0_70, %c0_71], %158 {strides = array<i32>} : memref<8x8xf32, #tpu.memory_space<vmem>>, vector<8x8xf32>,
    } else {
    }
    %c0 = arith.constant 0 : index
    %c0_1 = arith.constant 0 : index
    %c0_2 = arith.constant 0 : index
    %3 = vector.load %arg7[%c0, %c0_1, %c0_2] : memref<1x8x96xf32, #tpu.memory_space<vmem>>, vector<1x1x96xf32>
    %4 = vector.shape_cast %3 : vector<1x1x96xf32> to vector<1x96xf32>
    %c0_3 = arith.constant 0 : index
    %c1 = arith.constant 1 : index
    %c0_4 = arith.constant 0 : index
    %5 = vector.load %arg7[%c0_3, %c1, %c0_4] : memref<1x8x96xf32, #tpu.memory_space<vmem>>, vector<1x1x32xf32>
    %6 = vector.shape_cast %5 : vector<1x1x32xf32> to vector<1x32xf32>
    %c0_5 = arith.constant 0 : index
    %c2 = arith.constant 2 : index
    %c0_6 = arith.constant 0 : index
    %7 = vector.load %arg7[%c0_5, %c2, %c0_6] : memref<1x8x96xf32, #tpu.memory_space<vmem>>, vector<1x1x32xf32>
    %8 = vector.shape_cast %7 : vector<1x1x32xf32> to vector<1x32xf32>
    %c0_7 = arith.constant 0 : index
    %c3 = arith.constant 3 : index
    %c0_8 = arith.constant 0 : index
    %9 = vector.load %arg7[%c0_7, %c3, %c0_8] : memref<1x8x96xf32, #tpu.memory_space<vmem>>, vector<1x1x32xf32>
    %10 = vector.shape_cast %9 : vector<1x1x32xf32> to vector<1x32xf32>
    %c0_9 = arith.constant 0 : index
    %c4 = arith.constant 4 : index
    %c0_10 = arith.constant 0 : index
    %11 = vector.load %arg7[%c0_9, %c4, %c0_10] : memref<1x8x96xf32, #tpu.memory_space<vmem>>, vector<1x1x32xf32>
    %12 = vector.shape_cast %11 : vector<1x1x32xf32> to vector<1x32xf32>
    %c0_11 = arith.constant 0 : index
    %c5 = arith.constant 5 : index
    %c0_12 = arith.constant 0 : index
    %13 = vector.load %arg7[%c0_11, %c5, %c0_12] : memref<1x8x96xf32, #tpu.memory_space<vmem>>, vector<1x1x32xf32>
    %14 = vector.shape_cast %13 : vector<1x1x32xf32> to vector<1x32xf32>
    %c0_13 = arith.constant 0 : index
    %c6 = arith.constant 6 : index
    %c0_14 = arith.constant 0 : index
    %15 = vector.load %arg7[%c0_13, %c6, %c0_14] : memref<1x8x96xf32, #tpu.memory_space<vmem>>, vector<1x1x64xf32>
    %16 = vector.shape_cast %15 : vector<1x1x64xf32> to vector<1x64xf32>
    %c0_15 = arith.constant 0 : index
    %c7 = arith.constant 7 : index
    %c0_16 = arith.constant 0 : index
    %17 = vector.load %arg7[%c0_15, %c7, %c0_16] : memref<1x8x96xf32, #tpu.memory_space<vmem>>, vector<1x1x32xf32>
    %18 = vector.shape_cast %17 : vector<1x1x32xf32> to vector<1x32xf32>
    %c0_17 = arith.constant 0 : index
    %c0_18 = arith.constant 0 : index
    %19 = vector.load %arg9[%c0_17, %c0_18] : memref<16x32xf32, #tpu.memory_space<vmem>>, vector<16x32xf32>
    %c0_19 = arith.constant 0 : index
    %c0_20 = arith.constant 0 : index
    %20 = vector.load %arg10[%c0_19, %c0_20] : memref<8x8xf32, #tpu.memory_space<vmem>>, vector<8x8xf32>
    %21 = vector.shape_cast %20 : vector<8x8xf32> to vector<1x8x8xf32>
    %cst = arith.constant dense<0.000000e+00> : vector<16xf32>
    %22 = vector.multi_reduction <add>, %19, %cst [1] : vector<16x32xf32> to vector<16xf32>
    %23 = vector.shape_cast %22 : vector<16xf32> to vector<16x1xf32>
    %cst_21 = arith.constant 3.200000e+01 : f32
    %24 = vector.broadcast %cst_21 : f32 to vector<16x1xf32>
    %25 = arith.divf %23, %24 : vector<16x1xf32>
    %26 = vector.broadcast %25 : vector<16x1xf32> to vector<16x32xf32>
    %27 = arith.subf %19, %26 : vector<16x32xf32>
    %28 = arith.mulf %27, %27 : vector<16x32xf32>
    %cst_22 = arith.constant dense<0.000000e+00> : vector<16xf32>
    %29 = vector.multi_reduction <add>, %28, %cst_22 [1] : vector<16x32xf32> to vector<16xf32>
    %30 = vector.shape_cast %29 : vector<16xf32> to vector<16x1xf32>
    %cst_23 = arith.constant 3.200000e+01 : f32
    %31 = vector.broadcast %cst_23 : f32 to vector<16x1xf32>
    %32 = arith.divf %30, %31 : vector<16x1xf32>
    %33 = vector.broadcast %25 : vector<16x1xf32> to vector<16x32xf32>
    %34 = arith.subf %19, %33 : vector<16x32xf32>
    %cst_24 = arith.constant 9.99999974E-6 : f32
    %35 = vector.broadcast %cst_24 : f32 to vector<16x1xf32>
    %36 = arith.addf %32, %35 : vector<16x1xf32>
    %37 = math.rsqrt %36 : vector<16x1xf32>
    %38 = vector.broadcast %37 : vector<16x1xf32> to vector<16x32xf32>
    %39 = arith.mulf %34, %38 : vector<16x32xf32>
    %40 = vector.broadcast %8 : vector<1x32xf32> to vector<16x32xf32>
    %41 = arith.mulf %39, %40 : vector<16x32xf32>
    %42 = vector.broadcast %10 : vector<1x32xf32> to vector<16x32xf32>
    %43 = arith.addf %41, %42 : vector<16x32xf32>
    %44 = arith.truncf %43 : vector<16x32xf32> to vector<16x32xbf16>
    %c0_25 = arith.constant 0 : index
    %c0_26 = arith.constant 0 : index
    %c0_27 = arith.constant 0 : index
    %45 = vector.load %arg3[%c0_25, %c0_26, %c0_27] : memref<1x32x96xbf16, #tpu.memory_space<vmem>>, vector<1x32x96xbf16>
    %46 = vector.shape_cast %45 : vector<1x32x96xbf16> to vector<32x96xbf16>
    %cst_28 = arith.constant dense<0.000000e+00> : vector<16x96xf32>
    %47 = tpu.matmul %44, %46, %cst_28 {dimension_numbers = #tpu.dot_dimension_numbers<[1], [0], [0], [1], [0, 0, 1, 1], [], []>} : vector<16x32xbf16>, vector<32x96xbf16>, vector<16x96xf32> -> vector<16x96xf32>
    %48 = vector.broadcast %4 : vector<1x96xf32> to vector<16x96xf32>
    %49 = arith.addf %47, %48 : vector<16x96xf32>
    %cst_29 = arith.constant 0.000000e+00 : f32
    %50 = vector.broadcast %cst_29 : f32 to vector<16x32xf32>
    %51 = vector.extract_strided_slice %49 {offsets = [0, 0], sizes = [16, 16], strides = [1, 1]} : vector<16x96xf32> to vector<16x16xf32>
    %52 = vector.shape_cast %51 : vector<16x16xf32> to vector<2x8x16xf32>
    %cst_30 = arith.constant 2.500000e-01 : f32
    %53 = vector.broadcast %cst_30 : f32 to vector<2x8x16xf32>
    %54 = arith.mulf %52, %53 : vector<2x8x16xf32>
    %55 = vector.extract_strided_slice %49 {offsets = [0, 32], sizes = [16, 16], strides = [1, 1]} : vector<16x96xf32> to vector<16x16xf32>
    %56 = vector.shape_cast %55 : vector<16x16xf32> to vector<2x8x16xf32>
    %57 = vector.extract_strided_slice %49 {offsets = [0, 64], sizes = [16, 16], strides = [1, 1]} : vector<16x96xf32> to vector<16x16xf32>
    %58 = vector.shape_cast %57 : vector<16x16xf32> to vector<2x8x16xf32>
    "tpu.trace_start"() <{level = 10 : i32, message = "bqd,bkd->bqk"}> : () -> ()
    %cst_31 = arith.constant dense<0.000000e+00> : vector<2x8x8xf32>
    %59 = tpu.matmul %54, %56, %cst_31 {dimension_numbers = #tpu.dot_dimension_numbers<[2], [2], [1], [1], [0, 0, 0, 1, 1, 1], [0], [0]>} : vector<2x8x16xf32>, vector<2x8x16xf32>, vector<2x8x8xf32> -> vector<2x8x8xf32>
    "tpu.trace_stop"() : () -> ()
    %60 = vector.broadcast %21 : vector<1x8x8xf32> to vector<2x8x8xf32>
    %61 = arith.addf %59, %60 : vector<2x8x8xf32>
    %cst_32 = arith.constant dense<0xFF800000> : vector<2x8xf32>
    %62 = vector.multi_reduction <maximumf>, %61, %cst_32 [2] : vector<2x8x8xf32> to vector<2x8xf32>
    %63 = vector.shape_cast %62 : vector<2x8xf32> to vector<2x8x1xf32>
    %64 = vector.broadcast %63 : vector<2x8x1xf32> to vector<2x8x8xf32>
    %65 = arith.subf %61, %64 : vector<2x8x8xf32>
    %66 = math.exp %65 : vector<2x8x8xf32>
    %cst_33 = arith.constant dense<0.000000e+00> : vector<2x8xf32>
    %67 = vector.multi_reduction <add>, %66, %cst_33 [2] : vector<2x8x8xf32> to vector<2x8xf32>
    %68 = vector.shape_cast %67 : vector<2x8xf32> to vector<2x8x1xf32>
    %69 = vector.broadcast %68 : vector<2x8x1xf32> to vector<2x8x8xf32>
    %70 = arith.divf %66, %69 : vector<2x8x8xf32>
    "tpu.trace_start"() <{level = 10 : i32, message = "bqk,bkd->bqd"}> : () -> ()
    %cst_34 = arith.constant dense<0.000000e+00> : vector<2x8x16xf32>
    %71 = tpu.matmul %70, %58, %cst_34 {dimension_numbers = #tpu.dot_dimension_numbers<[2], [1], [1], [2], [0, 0, 0, 1, 1, 2], [0], [0]>} : vector<2x8x8xf32>, vector<2x8x16xf32>, vector<2x8x16xf32> -> vector<2x8x16xf32>
    "tpu.trace_stop"() : () -> ()
    %72 = vector.shape_cast %71 : vector<2x8x16xf32> to vector<16x16xf32>
    %73 = arith.truncf %72 : vector<16x16xf32> to vector<16x16xbf16>
    %c0_35 = arith.constant 0 : index
    %c0_36 = arith.constant 0 : index
    %c0_37 = arith.constant 0 : index
    %74 = vector.load %arg4[%c0_35, %c0_36, %c0_37] : memref<1x32x32xbf16, #tpu.memory_space<vmem>>, vector<1x16x32xbf16>
    %75 = vector.shape_cast %74 : vector<1x16x32xbf16> to vector<16x32xbf16>
    %cst_38 = arith.constant dense<0.000000e+00> : vector<16x32xf32>
    %76 = tpu.matmul %73, %75, %cst_38 {dimension_numbers = #tpu.dot_dimension_numbers<[1], [0], [0], [1], [0, 0, 1, 1], [], []>} : vector<16x16xbf16>, vector<16x32xbf16>, vector<16x32xf32> -> vector<16x32xf32>
    %77 = arith.addf %50, %76 : vector<16x32xf32>
    %78 = vector.extract_strided_slice %49 {offsets = [0, 16], sizes = [16, 16], strides = [1, 1]} : vector<16x96xf32> to vector<16x16xf32>
    %79 = vector.shape_cast %78 : vector<16x16xf32> to vector<2x8x16xf32>
    %cst_39 = arith.constant 2.500000e-01 : f32
    %80 = vector.broadcast %cst_39 : f32 to vector<2x8x16xf32>
    %81 = arith.mulf %79, %80 : vector<2x8x16xf32>
    %82 = vector.extract_strided_slice %49 {offsets = [0, 48], sizes = [16, 16], strides = [1, 1]} : vector<16x96xf32> to vector<16x16xf32>
    %83 = vector.shape_cast %82 : vector<16x16xf32> to vector<2x8x16xf32>
    %84 = vector.extract_strided_slice %49 {offsets = [0, 80], sizes = [16, 16], strides = [1, 1]} : vector<16x96xf32> to vector<16x16xf32>
    %85 = vector.shape_cast %84 : vector<16x16xf32> to vector<2x8x16xf32>
    "tpu.trace_start"() <{level = 10 : i32, message = "bqd,bkd->bqk"}> : () -> ()
    %cst_40 = arith.constant dense<0.000000e+00> : vector<2x8x8xf32>
    %86 = tpu.matmul %81, %83, %cst_40 {dimension_numbers = #tpu.dot_dimension_numbers<[2], [2], [1], [1], [0, 0, 0, 1, 1, 1], [0], [0]>} : vector<2x8x16xf32>, vector<2x8x16xf32>, vector<2x8x8xf32> -> vector<2x8x8xf32>
    "tpu.trace_stop"() : () -> ()
    %87 = vector.broadcast %21 : vector<1x8x8xf32> to vector<2x8x8xf32>
    %88 = arith.addf %86, %87 : vector<2x8x8xf32>
    %cst_41 = arith.constant dense<0xFF800000> : vector<2x8xf32>
    %89 = vector.multi_reduction <maximumf>, %88, %cst_41 [2] : vector<2x8x8xf32> to vector<2x8xf32>
    %90 = vector.shape_cast %89 : vector<2x8xf32> to vector<2x8x1xf32>
    %91 = vector.broadcast %90 : vector<2x8x1xf32> to vector<2x8x8xf32>
    %92 = arith.subf %88, %91 : vector<2x8x8xf32>
    %93 = math.exp %92 : vector<2x8x8xf32>
    %cst_42 = arith.constant dense<0.000000e+00> : vector<2x8xf32>
    %94 = vector.multi_reduction <add>, %93, %cst_42 [2] : vector<2x8x8xf32> to vector<2x8xf32>
    %95 = vector.shape_cast %94 : vector<2x8xf32> to vector<2x8x1xf32>
    %96 = vector.broadcast %95 : vector<2x8x1xf32> to vector<2x8x8xf32>
    %97 = arith.divf %93, %96 : vector<2x8x8xf32>
    "tpu.trace_start"() <{level = 10 : i32, message = "bqk,bkd->bqd"}> : () -> ()
    %cst_43 = arith.constant dense<0.000000e+00> : vector<2x8x16xf32>
    %98 = tpu.matmul %97, %85, %cst_43 {dimension_numbers = #tpu.dot_dimension_numbers<[2], [1], [1], [2], [0, 0, 0, 1, 1, 2], [0], [0]>} : vector<2x8x8xf32>, vector<2x8x16xf32>, vector<2x8x16xf32> -> vector<2x8x16xf32>
    "tpu.trace_stop"() : () -> ()
    %99 = vector.shape_cast %98 : vector<2x8x16xf32> to vector<16x16xf32>
    %100 = arith.truncf %99 : vector<16x16xf32> to vector<16x16xbf16>
    %c0_44 = arith.constant 0 : index
    %c16 = arith.constant 16 : index
    %c0_45 = arith.constant 0 : index
    %101 = vector.load %arg4[%c0_44, %c16, %c0_45] : memref<1x32x32xbf16, #tpu.memory_space<vmem>>, vector<1x16x32xbf16>
    %102 = vector.shape_cast %101 : vector<1x16x32xbf16> to vector<16x32xbf16>
    %cst_46 = arith.constant dense<0.000000e+00> : vector<16x32xf32>
    %103 = tpu.matmul %100, %102, %cst_46 {dimension_numbers = #tpu.dot_dimension_numbers<[1], [0], [0], [1], [0, 0, 1, 1], [], []>} : vector<16x16xbf16>, vector<16x32xbf16>, vector<16x32xf32> -> vector<16x32xf32>
    %104 = arith.addf %77, %103 : vector<16x32xf32>
    %105 = arith.addf %19, %104 : vector<16x32xf32>
    %106 = vector.broadcast %6 : vector<1x32xf32> to vector<16x32xf32>
    %107 = arith.addf %105, %106 : vector<16x32xf32>
    %cst_47 = arith.constant dense<0.000000e+00> : vector<16xf32>
    %108 = vector.multi_reduction <add>, %107, %cst_47 [1] : vector<16x32xf32> to vector<16xf32>
    %109 = vector.shape_cast %108 : vector<16xf32> to vector<16x1xf32>
    %cst_48 = arith.constant 3.200000e+01 : f32
    %110 = vector.broadcast %cst_48 : f32 to vector<16x1xf32>
    %111 = arith.divf %109, %110 : vector<16x1xf32>
    %112 = vector.broadcast %111 : vector<16x1xf32> to vector<16x32xf32>
    %113 = arith.subf %107, %112 : vector<16x32xf32>
    %114 = arith.mulf %113, %113 : vector<16x32xf32>
    %cst_49 = arith.constant dense<0.000000e+00> : vector<16xf32>
    %115 = vector.multi_reduction <add>, %114, %cst_49 [1] : vector<16x32xf32> to vector<16xf32>
    %116 = vector.shape_cast %115 : vector<16xf32> to vector<16x1xf32>
    %cst_50 = arith.constant 3.200000e+01 : f32
    %117 = vector.broadcast %cst_50 : f32 to vector<16x1xf32>
    %118 = arith.divf %116, %117 : vector<16x1xf32>
    %119 = vector.broadcast %111 : vector<16x1xf32> to vector<16x32xf32>
    %120 = arith.subf %107, %119 : vector<16x32xf32>
    %cst_51 = arith.constant 9.99999974E-6 : f32
    %121 = vector.broadcast %cst_51 : f32 to vector<16x1xf32>
    %122 = arith.addf %118, %121 : vector<16x1xf32>
    %123 = math.rsqrt %122 : vector<16x1xf32>
    %124 = vector.broadcast %123 : vector<16x1xf32> to vector<16x32xf32>
    %125 = arith.mulf %120, %124 : vector<16x32xf32>
    %126 = vector.broadcast %12 : vector<1x32xf32> to vector<16x32xf32>
    %127 = arith.mulf %125, %126 : vector<16x32xf32>
    %128 = vector.broadcast %14 : vector<1x32xf32> to vector<16x32xf32>
    %129 = arith.addf %127, %128 : vector<16x32xf32>
    %130 = arith.truncf %129 : vector<16x32xf32> to vector<16x32xbf16>
    %c0_52 = arith.constant 0 : index
    %c0_53 = arith.constant 0 : index
    %c0_54 = arith.constant 0 : index
    %131 = vector.load %arg5[%c0_52, %c0_53, %c0_54] : memref<1x32x64xbf16, #tpu.memory_space<vmem>>, vector<1x32x64xbf16>
    %132 = vector.shape_cast %131 : vector<1x32x64xbf16> to vector<32x64xbf16>
    %cst_55 = arith.constant dense<0.000000e+00> : vector<16x64xf32>
    %133 = tpu.matmul %130, %132, %cst_55 {dimension_numbers = #tpu.dot_dimension_numbers<[1], [0], [0], [1], [0, 0, 1, 1], [], []>} : vector<16x32xbf16>, vector<32x64xbf16>, vector<16x64xf32> -> vector<16x64xf32>
    %134 = vector.broadcast %16 : vector<1x64xf32> to vector<16x64xf32>
    %135 = arith.addf %133, %134 : vector<16x64xf32>
    %cst_56 = arith.constant 0.000000e+00 : f32
    %136 = vector.broadcast %cst_56 : f32 to vector<16x64xf32>
    %137 = arith.maximumf %135, %136 : vector<16x64xf32>
    %138 = arith.truncf %137 : vector<16x64xf32> to vector<16x64xbf16>
    %c0_57 = arith.constant 0 : index
    %c0_58 = arith.constant 0 : index
    %c0_59 = arith.constant 0 : index
    %139 = vector.load %arg6[%c0_57, %c0_58, %c0_59] : memref<1x64x32xbf16, #tpu.memory_space<vmem>>, vector<1x64x32xbf16>
    %140 = vector.shape_cast %139 : vector<1x64x32xbf16> to vector<64x32xbf16>
    %cst_60 = arith.constant dense<0.000000e+00> : vector<16x32xf32>
    %141 = tpu.matmul %138, %140, %cst_60 {dimension_numbers = #tpu.dot_dimension_numbers<[1], [0], [0], [1], [0, 0, 1, 1], [], []>} : vector<16x64xbf16>, vector<64x32xbf16>, vector<16x32xf32> -> vector<16x32xf32>
    %142 = vector.broadcast %18 : vector<1x32xf32> to vector<16x32xf32>
    %143 = arith.addf %141, %142 : vector<16x32xf32>
    %144 = arith.addf %107, %143 : vector<16x32xf32>
    %c1_i32 = arith.constant 1 : i32
    %145 = arith.cmpi slt, %arg1, %c1_i32 : i32
    %146 = arith.extui %145 : i1 to i32
    %c0_i32_61 = arith.constant 0 : i32
    %147 = arith.cmpi ne, %146, %c0_i32_61 : i32
    scf.if %147 {
      %c0_64 = arith.constant 0 : index
      %c0_65 = arith.constant 0 : index
      %151 = vector.load %arg9[%c0_64, %c0_65] : memref<16x32xf32, #tpu.memory_space<vmem>>, vector<16x32xf32>
      tpu.vector_store %arg9[%c0_64, %c0_65], %144 {strides = array<i32>} : memref<16x32xf32, #tpu.memory_space<vmem>>, vector<16x32xf32>,
    } else {
    }
    %c1_i32_62 = arith.constant 1 : i32
    %148 = arith.cmpi eq, %arg1, %c1_i32_62 : i32
    %149 = arith.extui %148 : i1 to i32
    %c0_i32_63 = arith.constant 0 : i32
    %150 = arith.cmpi ne, %149, %c0_i32_63 : i32
    scf.if %150 {
      %c0_64 = arith.constant 0 : index
      %c0_65 = arith.constant 0 : index
      %151 = vector.load %arg8[%c0_64, %c0_65] : memref<16x32xf32, #tpu.memory_space<vmem>>, vector<16x32xf32>
      tpu.vector_store %arg8[%c0_64, %c0_65], %144 {strides = array<i32>} : memref<16x32xf32, #tpu.memory_space<vmem>>, vector<16x32xf32>,
    } else {
    }
    return
  }
  func.func @transform_0(%arg0: i32, %arg1: i32) -> (i32, i32) {
    %c0_i32 = arith.constant 0 : i32
    %c0_i32_0 = arith.constant 0 : i32
    return %arg0, %c0_i32 : i32, i32
  }
  func.func @transform_1(%arg0: i32, %arg1: i32) -> (i32, i32, i32) {
    %c0_i32 = arith.constant 0 : i32
    %c0_i32_0 = arith.constant 0 : i32
    %c0_i32_1 = arith.constant 0 : i32
    return %arg1, %c0_i32, %c0_i32_0 : i32, i32, i32
  }
  func.func @transform_2(%arg0: i32, %arg1: i32) -> (i32, i32, i32) {
    %c0_i32 = arith.constant 0 : i32
    %c0_i32_0 = arith.constant 0 : i32
    %c0_i32_1 = arith.constant 0 : i32
    return %arg1, %c0_i32, %c0_i32_0 : i32, i32, i32
  }
  func.func @transform_3(%arg0: i32, %arg1: i32) -> (i32, i32, i32) {
    %c0_i32 = arith.constant 0 : i32
    %c0_i32_0 = arith.constant 0 : i32
    %c0_i32_1 = arith.constant 0 : i32
    return %arg1, %c0_i32, %c0_i32_0 : i32, i32, i32
  }
  func.func @transform_4(%arg0: i32, %arg1: i32) -> (i32, i32, i32) {
    %c0_i32 = arith.constant 0 : i32
    %c0_i32_0 = arith.constant 0 : i32
    %c0_i32_1 = arith.constant 0 : i32
    return %arg1, %c0_i32, %c0_i32_0 : i32, i32, i32
  }
  func.func @transform_5(%arg0: i32, %arg1: i32) -> (i32, i32, i32) {
    %c0_i32 = arith.constant 0 : i32
    %c0_i32_0 = arith.constant 0 : i32
    %c0_i32_1 = arith.constant 0 : i32
    return %arg1, %c0_i32, %c0_i32_0 : i32, i32, i32
  }
  func.func @transform_6(%arg0: i32, %arg1: i32) -> (i32, i32) {
    %c0_i32 = arith.constant 0 : i32
    %c0_i32_0 = arith.constant 0 : i32
    return %arg0, %c0_i32 : i32, i32
  }
}

</mosaic_0001>

<llo_original>
// kernel: encoder_forward.2
$region0: #{encoder_forward.2}
  #allocation0 [shape = 'u32[]', space=smem, size = 0x4, offset = 0x4, fixed_abs, tag = 'smem constant byte address 0x4 - core index']
  #allocation1 [shape = 'u32[144,128]{1,0:T(1,128)}', space=vmem, size = 0x12000, scoped, tag = 'internal scratch']
  %s0 = inlined_call_operand.vmem [shape: f32[16,32], index: 0, kind: input, shape index: {}]
  %s1 = inlined_call_operand.vmem [shape: bf16[32,64], index: 1, kind: input, shape index: {}]
  %s2 = inlined_call_operand.vmem [shape: f32[1,64], index: 2, kind: input, shape index: {}]
  %s3 = inlined_call_operand.vmem [shape: f32[16,32], index: 3, kind: output, shape index: {}]
  %s4 = sld [smem:[#allocation0]]
  $region22: #{encoder_forward.2} parent=0
    _
  %s6 = ssub.s32 1, %s4
  %s7 = scalar_select 0, %s6, %s4
  // Predicated region
  $region2: #{encoder_forward.2} parent=0 // pred_check
    _
  $region3: #{encoder_forward.2} parent=0 // pred_check_branch
    %9 = sbr.rel (0) target = $region5
  $region4: #{encoder_forward.2} parent=0 // pred_region
    _
  $region5: #{encoder_forward.2} parent=0 // pred_fallthru
    _
  // Predicated region
  $region6: #{encoder_forward.2} parent=0 // pred_check
    _
  $region7: #{encoder_forward.2} parent=0 // pred_check_branch
    %11 = sbr.rel (0) target = $region9
  $region8: #{encoder_forward.2} parent=0 // pred_region
    _
  $region9: #{encoder_forward.2} parent=0 // pred_fallthru
    _
  // Predicated region
  $region10: #{encoder_forward.2} parent=0 // pred_check
    _
  $region11: #{encoder_forward.2} parent=0 // pred_check_branch
    %13 = sbr.rel (0) target = $region13
  $region12: #{encoder_forward.2} parent=0 // pred_region
    _
  $region13: #{encoder_forward.2} parent=0 // pred_fallthru
    _
  %v15 = vld [vmem:[%s0] sm:$0xff]
  %v16 = vld [vmem:[%s0 + $0x8] sm:$0xff]
  %v17 = vpack.c.bf16 %v16, %v15
  %v18 = vld [vmem:[%s1] sm:$0xf]
  %v19 = vld [vmem:[%s1 + $0x4] sm:$0xf]
  %v20 = vld [vmem:[%s1 + $0x8] sm:$0xf]
  %v21 = vld [vmem:[%s1 + $0xc] sm:$0xf]
  %v22 = vld [vmem:[%s2] sm:$0x1]
  %v24 = vlaneseq
  %v25 = vshrl.u32 %v24, 7
  %v26 = vsub.s32 0, %v25
  %v27 = vrot.slane %v22, %v26
  %v33 = vunpack.c.l.b16 %v18
  %v34 = vunpack.c.l.b16 %v19
  %v35 = vunpack.c.l.b16 %v20
  %v36 = vunpack.c.l.b16 %v21
  %v37 = vpack.c.b16 %v34, %v33
  %v38 = vpack.c.b16 %v36, %v35
  %vm41 = vcmask 261120
  %v43 = vsel %vm41, %v17, 0
  %45 = vmatprep.subr.bf16.mxu0 0
  %46 = vmatpush1.bf16.msra.mxu0 0
  %47 = vmatprep.subr.bf16.mxu0 0
  %48 = vmatpush1.bf16.msra.mxu0 0
  %49 = vmatprep.subr.bf16.mxu0 0
  %50 = vmatpush1.bf16.msra.mxu0 0
  %51 = vmatprep.subr.bf16.mxu0 0
  %52 = vmatpush1.bf16.msra.mxu0 0
  %53 = vmatprep.subr.bf16.mxu0 0
  %54 = vmatpush1.bf16.msra.mxu0 0
  %55 = vmatprep.subr.bf16.mxu0 0
  %56 = vmatpush1.bf16.msra.mxu0 0
  %57 = vmatprep.subr.bf16.mxu0 0
  %58 = vmatpush1.bf16.msra.mxu0 %v38
  %59 = vmatprep.subr.bf16.mxu0 0
  %60 = vmatpush1.bf16.msra.mxu0 %v37
  %61 = vmatprep.subr.bf16.mxu0 0
  %62 = vmatpush2.bf16.msra.mxu0 0
  %63 = vmatprep.subr.bf16.mxu0 0
  %64 = vmatpush2.bf16.msra.mxu0 0
  %65 = vmatprep.subr.bf16.mxu0 0
  %66 = vmatpush2.bf16.msra.mxu0 0
  %67 = vmatprep.subr.bf16.mxu0 0
  %68 = vmatpush2.bf16.msra.mxu0 0
  %69 = vmatprep.subr.bf16.mxu0 0
  %70 = vmatpush2.bf16.msra.mxu0 0
  %71 = vmatprep.subr.bf16.mxu0 0
  %72 = vmatpush2.bf16.msra.mxu0 0
  %73 = vmatprep.subr.bf16.mxu0 0
  %74 = vmatpush2.bf16.msra.mxu0 0
  %75 = vmatprep.subr.bf16.mxu0 0
  %76 = vmatpush2.bf16.msra.mxu0 0
  %77 = vmatprep.mubr.bf16.mxu0 0
  %78 = vmatmul.mubr.bf16.gmra.mxu0 %v43
  %v79 = vpop.f32.mrf.mxu0
  %v80 = vadd.f32 %v27, %v79
  %v81 = vpop.f32.mrf.mxu0
  %v82 = vpop.f32.mrf.mxu0
  %v83 = vadd.f32 %v27, %v82
  %v84 = vpop.f32.mrf.mxu0
  %85 = vdwg.mxu0
  %v86 = vsub.f32 0.0, %v80
  %v87 = vsub.f32 0.0, %v83
  %v88 = vmul.f32 %v86, 1.442695
  %v89 = vpow.pop %v88
  %v90 = vmul.f32 %v87, 1.442695
  %v91 = vpow.pop %v90
  %v92 = vadd.f32 %v89, 1.0
  %v93 = vadd.f32 %v91, 1.0
  %v94 = vrcp.pop %v92
  %v95 = vmul.f32 1.0, %v94
  %v96 = vrcp.pop %v93
  %v97 = vmul.f32 1.0, %v96
  %100 = vrot.lane.b32.xlu0 %v95, 96
  %v101 = vpop.permute.xlu0 %100
  %102 = vrot.lane.b32.xlu0 %v97, 96
  %v103 = vpop.permute.xlu0 %102
  %v106 = vmul.f32 %v80, %v101
  %v107 = vmul.f32 %v83, %v103
  %108 = vst.msk [vmem:[%s3] sm:$0xff] %vm41, %v106
  %109 = vst.msk [vmem:[%s3 + $0x8] sm:$0xff] %vm41, %v107
  // Predicated region
  $region14: #{encoder_forward.2} parent=0 // pred_check
    _
  $region15: #{encoder_forward.2} parent=0 // pred_check_branch
    %111 = sbr.rel (0) target = $region17
  $region16: #{encoder_forward.2} parent=0 // pred_region
    _
  $region17: #{encoder_forward.2} parent=0 // pred_fallthru
    _
  // Predicated region
  $region18: #{encoder_forward.2} parent=0 // pred_check
    _
  $region19: #{encoder_forward.2} parent=0 // pred_check_branch
    %113 = sbr.rel (0) target = $region21
  $region20: #{encoder_forward.2} parent=0 // pred_region
    _
  $region21: #{encoder_forward.2} parent=0 // pred_fallthru
    _

// kernel: encoder_forward.3
$region0: #{encoder_forward.3}
  #allocation0 [shape = 'u32[]', space=smem, size = 0x4, offset = 0x4, fixed_abs, tag = 'smem constant byte address 0x4 - core index']
  #allocation1 [shape = 'u32[144,128]{1,0:T(1,128)}', space=vmem, size = 0x12000, scoped, tag = 'internal scratch']
  #allocation2 [shape = 'f32[16,32]{1,0:T(8,128)}', space=vmem, size = 0x2000, scoped, tag = 'scratch operand']
  #allocation3 [shape = 'f32[8,8]{1,0:T(8,128)}', space=vmem, size = 0x1000, scoped, tag = 'scratch operand']
  %s0 = inlined_call_operand.vmem [shape: f32[16,32], index: 0, kind: input, shape index: {}]
  %s1 = inlined_call_operand.vmem [shape: bf16[2,32,96], index: 1, kind: input, shape index: {}]
  %s2 = inlined_call_operand.vmem [shape: bf16[2,32,32], index: 2, kind: input, shape index: {}]
  %s3 = inlined_call_operand.vmem [shape: bf16[2,32,64], index: 3, kind: input, shape index: {}]
  %s4 = inlined_call_operand.vmem [shape: bf16[2,64,32], index: 4, kind: input, shape index: {}]
  %s5 = inlined_call_operand.vmem [shape: f32[2,8,96], index: 5, kind: input, shape index: {}]
  %s6 = inlined_call_operand.vmem [shape: f32[16,32], index: 6, kind: output, shape index: {}]
  %s7 = sld [smem:[#allocation0]]
  $region69: #{encoder_forward.3} parent=0
    _
  %s9 = ssub.s32 1, %s7
  %s10 = scalar_select 0, %s9, %s7
  loop: start=0, step=1, limit=4
  $region2: #{encoder_forward.3} parent=0 // loop_pre_header
    _
  $region3: #{encoder_forward.3} parent=0 // loop_header
    %s12 = sphi 0, %s16
    %p13 = scmp.ge.s32.totalorder %s12, 4
    %s19 = sphi 0, %s31
    %s20 = sphi 0, %s27
    %s21 = sphi 0, %s19
    %s22 = sphi 0, %s20
    %s23 = sphi 0, %s21
    %s24 = sphi 0, %s22
    %s34 = sphi 0, %s36
    %s37 = sphi 0, %s34
    %s38 = sphi 0, %s37
    %s54 = sphi 0, %s38
    %s60 = sphi 0, %s62
    %s63 = sphi 0, %s60
    %s64 = sphi 0, %s63
    %s80 = sphi 0, %s64
    %s86 = sphi 0, %s88
    %s89 = sphi 0, %s86
    %s90 = sphi 0, %s89
    %s106 = sphi 0, %s90
    %s112 = sphi 0, %s114
    %s115 = sphi 0, %s112
    %s116 = sphi 0, %s115
    %s132 = sphi 0, %s116
    %s138 = sphi 0, %s140
    %s141 = sphi 0, %s138
    %s142 = sphi 0, %s141
    %s158 = sphi 0, %s142
    %s164 = sphi 0, %s166
    %s167 = sphi 0, %s164
    %s168 = sphi 0, %s167
    %s184 = sphi 0, %s168
    %s190 = sphi 0, %s192
    %s193 = sphi 0, %s190
    %s194 = sphi 0, %s193
    %s210 = sphi 0, %s194
  $region4: #{encoder_forward.3} parent=0 // loop_header_branch
    %15 = sbr.rel (%p13) target = $region8
  $region5: #{encoder_forward.3} parent=0 // loop_body
    %s17 = ssub.s32 %s12, 1
    %s18 = ssub.s32 %s12, 2
    %s25 = sadd.s32 1, %s20
    %p26 = scmp.ge.s32.totalorder %s25, 2
    %s27 = scalar_select %p26, 0, %s25
    %s28 = sadd.s32 1, %s19
    %s29 = scalar_select %p26, %s28, %s19
    %p30 = scmp.ge.s32.totalorder %s29, 1
    %s31 = scalar_select %p30, 0, %s29
    %s32 = ssub.s32 %s19, %s31
    %p33 = scmp.eq.s32.totalorder %s32, 0
    %s35 = sadd.s32 %s34, 1
    %s36 = scalar_select %p33, %s34, %s35
    %p39 = pneg %p33
    %p40 = scmp.eq.s32.totalorder %s12, 1
    %p41 = por %p39, %p40
    %p42 = scmp.ne.s32.totalorder %s34, %s37
    %p43 = scmp.eq.s32.totalorder %s12, 0
    %p44 = por %p42, %p43
    %p45 = scmp.ne.s32.totalorder %s34, %s37
    %p46 = scmp.eq.s32.totalorder %s17, 1
    %p47 = por %p45, %p46
    %p48 = scmp.ne.s32.totalorder %s37, %s38
    %p49 = scmp.eq.s32.totalorder %s17, 0
    %p50 = por %p48, %p49
    %p51 = scmp.ne.s32.totalorder %s37, %s38
    %p52 = scmp.eq.s32.totalorder %s18, 1
    %p53 = por %p51, %p52
    %p55 = scmp.ne.s32.totalorder %s38, %s54
    %p56 = scmp.eq.s32.totalorder %s18, 0
    %p57 = por %p55, %p56
    %s58 = ssub.s32 %s20, %s27
    %p59 = scmp.eq.s32.totalorder %s58, 0
    %s61 = sadd.s32 %s60, 1
    %s62 = scalar_select %p59, %s60, %s61
    %p65 = pneg %p59
    %p66 = scmp.eq.s32.totalorder %s12, 1
    %p67 = por %p65, %p66
    %p68 = scmp.ne.s32.totalorder %s60, %s63
    %p69 = scmp.eq.s32.totalorder %s12, 0
    %p70 = por %p68, %p69
    %p71 = scmp.ne.s32.totalorder %s60, %s63
    %p72 = scmp.eq.s32.totalorder %s17, 1
    %p73 = por %p71, %p72
    %p74 = scmp.ne.s32.totalorder %s63, %s64
    %p75 = scmp.eq.s32.totalorder %s17, 0
    %p76 = por %p74, %p75
    %p77 = scmp.ne.s32.totalorder %s63, %s64
    %p78 = scmp.eq.s32.totalorder %s18, 1
    %p79 = por %p77, %p78
    %p81 = scmp.ne.s32.totalorder %s64, %s80
    %p82 = scmp.eq.s32.totalorder %s18, 0
    %p83 = por %p81, %p82
    %s84 = ssub.s32 %s20, %s27
    %p85 = scmp.eq.s32.totalorder %s84, 0
    %s87 = sadd.s32 %s86, 1
    %s88 = scalar_select %p85, %s86, %s87
    %p91 = pneg %p85
    %p92 = scmp.eq.s32.totalorder %s12, 1
    %p93 = por %p91, %p92
    %p94 = scmp.ne.s32.totalorder %s86, %s89
    %p95 = scmp.eq.s32.totalorder %s12, 0
    %p96 = por %p94, %p95
    %p97 = scmp.ne.s32.totalorder %s86, %s89
    %p98 = scmp.eq.s32.totalorder %s17, 1
    %p99 = por %p97, %p98
    %p100 = scmp.ne.s32.totalorder %s89, %s90
    %p101 = scmp.eq.s32.totalorder %s17, 0
    %p102 = por %p100, %p101
    %p103 = scmp.ne.s32.totalorder %s89, %s90
    %p104 = scmp.eq.s32.totalorder %s18, 1
    %p105 = por %p103, %p104
    %p107 = scmp.ne.s32.totalorder %s90, %s106
    %p108 = scmp.eq.s32.totalorder %s18, 0
    %p109 = por %p107, %p108
    %s110 = ssub.s32 %s20, %s27
    %p111 = scmp.eq.s32.totalorder %s110, 0
    %s113 = sadd.s32 %s112, 1
    %s114 = scalar_select %p111, %s112, %s113
    %p117 = pneg %p111
    %p118 = scmp.eq.s32.totalorder %s12, 1
    %p119 = por %p117, %p118
    %p120 = scmp.ne.s32.totalorder %s112, %s115
    %p121 = scmp.eq.s32.totalorder %s12, 0
    %p122 = por %p120, %p121
    %p123 = scmp.ne.s32.totalorder %s112, %s115
    %p124 = scmp.eq.s32.totalorder %s17, 1
    %p125 = por %p123, %p124
    %p126 = scmp.ne.s32.totalorder %s115, %s116
    %p127 = scmp.eq.s32.totalorder %s17, 0
    %p128 = por %p126, %p127
    %p129 = scmp.ne.s32.totalorder %s115, %s116
    %p130 = scmp.eq.s32.totalorder %s18, 1
    %p131 = por %p129, %p130
    %p133 = scmp.ne.s32.totalorder %s116, %s132
    %p134 = scmp.eq.s32.totalorder %s18, 0
    %p135 = por %p133, %p134
    %s136 = ssub.s32 %s20, %s27
    %p137 = scmp.eq.s32.totalorder %s136, 0
    %s139 = sadd.s32 %s138, 1
    %s140 = scalar_select %p137, %s138, %s139
    %p143 = pneg %p137
    %p144 = scmp.eq.s32.totalorder %s12, 1
    %p145 = por %p143, %p144
    %p146 = scmp.ne.s32.totalorder %s138, %s141
    %p147 = scmp.eq.s32.totalorder %s12, 0
    %p148 = por %p146, %p147
    %p149 = scmp.ne.s32.totalorder %s138, %s141
    %p150 = scmp.eq.s32.totalorder %s17, 1
    %p151 = por %p149, %p150
    %p152 = scmp.ne.s32.totalorder %s141, %s142
    %p153 = scmp.eq.s32.totalorder %s17, 0
    %p154 = por %p152, %p153
    %p155 = scmp.ne.s32.totalorder %s141, %s142
    %p156 = scmp.eq.s32.totalorder %s18, 1
    %p157 = por %p155, %p156
    %p159 = scmp.ne.s32.totalorder %s142, %s158
    %p160 = scmp.eq.s32.totalorder %s18, 0
    %p161 = por %p159, %p160
    %s162 = ssub.s32 %s20, %s27
    %p163 = scmp.eq.s32.totalorder %s162, 0
    %s165 = sadd.s32 %s164, 1
    %s166 = scalar_select %p163, %s164, %s165
    %p169 = pneg %p163
    %p170 = scmp.eq.s32.totalorder %s12, 1
    %p171 = por %p169, %p170
    %p172 = scmp.ne.s32.totalorder %s164, %s167
    %p173 = scmp.eq.s32.totalorder %s12, 0
    %p174 = por %p172, %p173
    %p175 = scmp.ne.s32.totalorder %s164, %s167
    %p176 = scmp.eq.s32.totalorder %s17, 1
    %p177 = por %p175, %p176
    %p178 = scmp.ne.s32.totalorder %s167, %s168
    %p179 = scmp.eq.s32.totalorder %s17, 0
    %p180 = por %p178, %p179
    %p181 = scmp.ne.s32.totalorder %s167, %s168
    %p182 = scmp.eq.s32.totalorder %s18, 1
    %p183 = por %p181, %p182
    %p185 = scmp.ne.s32.totalorder %s168, %s184
    %p186 = scmp.eq.s32.totalorder %s18, 0
    %p187 = por %p185, %p186
    %s188 = ssub.s32 %s19, %s31
    %p189 = scmp.eq.s32.totalorder %s188, 0
    %s191 = sadd.s32 %s190, 1
    %s192 = scalar_select %p189, %s190, %s191
    %p195 = pneg %p189
    %p196 = scmp.eq.s32.totalorder %s12, 1
    %p197 = por %p195, %p196
    %p198 = scmp.ne.s32.totalorder %s190, %s193
    %p199 = scmp.eq.s32.totalorder %s12, 0
    %p200 = por %p198, %p199
    %p201 = scmp.ne.s32.totalorder %s190, %s193
    %p202 = scmp.eq.s32.totalorder %s17, 1
    %p203 = por %p201, %p202
    %p204 = scmp.ne.s32.totalorder %s193, %s194
    %p205 = scmp.eq.s32.totalorder %s17, 0
    %p206 = por %p204, %p205
    %p207 = scmp.ne.s32.totalorder %s193, %s194
    %p208 = scmp.eq.s32.totalorder %s18, 1
    %p209 = por %p207, %p208
    %p211 = scmp.ne.s32.totalorder %s194, %s210
    %p212 = scmp.eq.s32.totalorder %s18, 0
    %p213 = por %p211, %p212
    %p214 = scmp.le.s32.totalorder 1, %s12
    %p215 = scmp.lt.s32.totalorder %s12, 3
    %p216 = pnand %p214, %p215
    %p217 = pneg %p216
    // Predicated region
    $region9: #{encoder_forward.3} parent=5 // pred_check
      _
    $region10: #{encoder_forward.3} parent=5 // pred_check_branch
      %219 = sbr.rel (%p216) target = $region12
    $region11: #{encoder_forward.3} parent=5 // pred_region
      %s220 = ssub.s32 %s12, 1
      // Predicated region
      $region13: #{encoder_forward.3} parent=11 // pred_check
        %p221 = pneg %p50
      $region14: #{encoder_forward.3} parent=11 // pred_check_branch
        %223 = sbr.rel (%p221) target = $region16
      $region15: #{encoder_forward.3} parent=11 // pred_region
        %s224 = smul.u32 2, %s21
        %p225 = scmp.lt.s32.totalorder %s224, 1
        %s226 = scalar_select %p225, %s224, 1
        %s227 = smul.addr %s226, 8
        %s228 = scalar_lea.vmem %s0, %s227
        %s229 = smul.u32 2, %s21
      $region16: #{encoder_forward.3} parent=11 // pred_fallthru
        _
    $region12: #{encoder_forward.3} parent=5 // pred_fallthru
      _
    %p230 = scmp.lt.s32.totalorder %s12, 2
    // Predicated region
    $region17: #{encoder_forward.3} parent=5 // pred_check
      %p231 = pneg %p230
    $region18: #{encoder_forward.3} parent=5 // pred_check_branch
      %233 = sbr.rel (%p231) target = $region20
    $region19: #{encoder_forward.3} parent=5 // pred_region
      // Predicated region
      $region21: #{encoder_forward.3} parent=19 // pred_check
        %p234 = pneg %p70
      $region22: #{encoder_forward.3} parent=19 // pred_check_branch
        %236 = sbr.rel (%p234) target = $region24
      $region23: #{encoder_forward.3} parent=19 // pred_region
        %p237 = scmp.lt.s32.totalorder %s20, 1
        %s238 = scalar_select %p237, %s20, 1
        %s239 = smul.addr %s238, 4
        %s240 = smul.addr %s239, 4
        %s241 = scalar_lea.vmem %s1, %s240
      $region24: #{encoder_forward.3} parent=19 // pred_fallthru
        _
      // Predicated region
      $region25: #{encoder_forward.3} parent=19 // pred_check
        %p242 = pneg %p96
      $region26: #{encoder_forward.3} parent=19 // pred_check_branch
        %244 = sbr.rel (%p242) target = $region28
      $region27: #{encoder_forward.3} parent=19 // pred_region
        %p245 = scmp.lt.s32.totalorder %s20, 1
        %s246 = scalar_select %p245, %s20, 1
        %s247 = smul.addr %s246, 4
        %s248 = smul.addr %s247, 4
        %s249 = scalar_lea.vmem %s2, %s248
      $region28: #{encoder_forward.3} parent=19 // pred_fallthru
        _
      // Predicated region
      $region29: #{encoder_forward.3} parent=19 // pred_check
        %p250 = pneg %p122
      $region30: #{encoder_forward.3} parent=19 // pred_check_branch
        %252 = sbr.rel (%p250) target = $region32
      $region31: #{encoder_forward.3} parent=19 // pred_region
        %p253 = scmp.lt.s32.totalorder %s20, 1
        %s254 = scalar_select %p253, %s20, 1
        %s255 = smul.addr %s254, 4
        %s256 = smul.addr %s255, 4
        %s257 = scalar_lea.vmem %s3, %s256
      $region32: #{encoder_forward.3} parent=19 // pred_fallthru
        _
      // Predicated region
      $region33: #{encoder_forward.3} parent=19 // pred_check
        %p258 = pneg %p148
      $region34: #{encoder_forward.3} parent=19 // pred_check_branch
        %260 = sbr.rel (%p258) target = $region36
      $region35: #{encoder_forward.3} parent=19 // pred_region
        %p261 = scmp.lt.s32.totalorder %s20, 1
        %s262 = scalar_select %p261, %s20, 1
        %s263 = smul.addr %s262, 8
        %s264 = smul.addr %s263, 4
        %s265 = scalar_lea.vmem %s4, %s264
      $region36: #{encoder_forward.3} parent=19 // pred_fallthru
        _
      // Predicated region
      $region37: #{encoder_forward.3} parent=19 // pred_check
        %p266 = pneg %p174
      $region38: #{encoder_forward.3} parent=19 // pred_check_branch
        %268 = sbr.rel (%p266) target = $region40
      $region39: #{encoder_forward.3} parent=19 // pred_region
        %p269 = scmp.lt.s32.totalorder %s20, 1
        %s270 = scalar_select %p269, %s20, 1
        %s271 = smul.addr %s270, 8
        %s272 = scalar_lea.vmem %s5, %s271
      $region40: #{encoder_forward.3} parent=19 // pred_fallthru
        _
    $region20: #{encoder_forward.3} parent=5 // pred_fallthru
      _
    %p273 = scmp.le.s32.totalorder 1, %s12
    %p274 = scmp.lt.s32.totalorder %s12, 3
    %p275 = pnand %p273, %p274
    %p276 = pneg %p275
    // Predicated region
    $region41: #{encoder_forward.3} parent=5 // pred_check
      _
    $region42: #{encoder_forward.3} parent=5 // pred_check_branch
      %278 = sbr.rel (%p275) target = $region44
    $region43: #{encoder_forward.3} parent=5 // pred_region
      %s279 = ssub.s32 %s12, 1
      %s280 = smul.u32 2, %s21
      %p281 = scmp.lt.s32.totalorder %s280, 1
      %s282 = scalar_select %p281, %s280, 1
      %s283 = smul.addr %s282, 8
      %s284 = scalar_lea.vmem %s0, %s283
      %p285 = pneg %p50
      %p286 = pneg %p47
      %p287 = scmp.lt.s32.totalorder %s22, 1
      %s288 = scalar_select %p287, %s22, 1
      %s289 = smul.addr %s288, 4
      %s290 = smul.addr %s289, 4
      %s291 = scalar_lea.vmem %s1, %s290
      %p292 = pneg %p76
      %p293 = pneg %p73
      %p294 = scmp.lt.s32.totalorder %s22, 1
      %s295 = scalar_select %p294, %s22, 1
      %s296 = smul.addr %s295, 4
      %s297 = smul.addr %s296, 4
      %s298 = scalar_lea.vmem %s2, %s297
      %p299 = pneg %p102
      %p300 = pneg %p99
      %p301 = scmp.lt.s32.totalorder %s22, 1
      %s302 = scalar_select %p301, %s22, 1
      %s303 = smul.addr %s302, 4
      %s304 = smul.addr %s303, 4
      %s305 = scalar_lea.vmem %s3, %s304
      %p306 = pneg %p128
      %p307 = pneg %p125
      %p308 = scmp.lt.s32.totalorder %s22, 1
      %s309 = scalar_select %p308, %s22, 1
      %s310 = smul.addr %s309, 8
      %s311 = smul.addr %s310, 4
      %s312 = scalar_lea.vmem %s4, %s311
      %p313 = pneg %p154
      %p314 = pneg %p151
      %p315 = scmp.lt.s32.totalorder %s22, 1
      %s316 = scalar_select %p315, %s22, 1
      %s317 = smul.addr %s316, 8
      %s318 = scalar_lea.vmem %s5, %s317
      %p319 = pneg %p180
      %p320 = pneg %p177
      %p321 = pneg %p206
      %p322 = pneg %p203
      %s323 = smul.u32 2, %s21
      %p324 = scmp.lt.s32.totalorder %s323, 1
      %s325 = scalar_select %p324, %s323, 1
      %s326 = smul.addr %s325, 8
      %s327 = scalar_lea.vmem %s6, %s326
      %s328 = smul.u32 2, %s21
      %p329 = scmp.lt.s32.totalorder %s328, 1
      %s330 = scalar_select %p329, %s328, 1
      %s331 = smul.addr %s330, 8
      %s332 = scalar_lea.vmem %s0, %s331
      %s333 = smul.u32 2, %s21
      %p334 = scmp.lt.s32.totalorder %s22, 1
      %s335 = scalar_select %p334, %s22, 1
      %s336 = smul.addr %s335, 4
      %s337 = smul.addr %s336, 4
      %s338 = scalar_lea.vmem %s1, %s337
      %p339 = scmp.lt.s32.totalorder %s22, 1
      %s340 = scalar_select %p339, %s22, 1
      %s341 = smul.addr %s340, 4
      %s342 = smul.addr %s341, 4
      %s343 = scalar_lea.vmem %s2, %s342
      %p344 = scmp.lt.s32.totalorder %s22, 1
      %s345 = scalar_select %p344, %s22, 1
      %s346 = smul.addr %s345, 4
      %s347 = smul.addr %s346, 4
      %s348 = scalar_lea.vmem %s3, %s347
      %p349 = scmp.lt.s32.totalorder %s22, 1
      %s350 = scalar_select %p349, %s22, 1
      %s351 = smul.addr %s350, 8
      %s352 = smul.addr %s351, 4
      %s353 = scalar_lea.vmem %s4, %s352
      %p354 = scmp.lt.s32.totalorder %s22, 1
      %s355 = scalar_select %p354, %s22, 1
      %s356 = smul.addr %s355, 8
      %s357 = scalar_lea.vmem %s5, %s356
      %s358 = smul.u32 2, %s21
      %p359 = scmp.lt.s32.totalorder %s358, 1
      %s360 = scalar_select %p359, %s358, 1
      %s361 = smul.addr %s360, 8
      %s362 = scalar_lea.vmem %s6, %s361
      %s363 = smul.u32 2, %s21
      %p365 = scmp.eq.s32.totalorder %s22, 0
      // Predicated region
      $region45: #{encoder_forward.3} parent=43 // pred_check
        %p366 = pneg %p365
      $region46: #{encoder_forward.3} parent=43 // pred_check_branch
        %368 = sbr.rel (%p366) target = $region48
      $region47: #{encoder_forward.3} parent=43 // pred_region
        %v369 = vld [vmem:[%s332] sm:$0xff]
        %v370 = vld [vmem:[%s332 + $0x8] sm:$0xff]
        %vm371 = vcmask 261120
        %372 = vst.msk [vmem:[#allocation2] sm:$0xff] %vm371, %v369
        %373 = vst.msk [vmem:[#allocation2 + $0x8] sm:$0xff] %vm371, %v370
        %v374 = vlaneseq
        %v375 = vshrl.u32 %v374, 7
        %v376 = vlaneseq
        %v377 = vand.u32 %v376, 127
        %vm378 = vcmp.gt.s32.totalorder %v377, %v375
        %v379 = vsel %vm378, -1e+30, 0.0
        %vm380 = vcmask 64512
        %381 = vst.msk [vmem:[#allocation3] sm:$0xff] %vm380, %v379
      $region48: #{encoder_forward.3} parent=43 // pred_fallthru
        _
      %v382 = vld [vmem:[%s357] sm:$0x1]
      %v383 = vld [vmem:[%s357 + $0x1] sm:$0x1]
      %v384 = vld [vmem:[%s357 + $0x2] sm:$0x1]
      %v385 = vld [vmem:[%s357 + $0x3] sm:$0x1]
      %v386 = vld [vmem:[%s357 + $0x4] sm:$0x1]
      %v387 = vld [vmem:[%s357 + $0x5] sm:$0x1]
      %v388 = vld [vmem:[%s357 + $0x6] sm:$0x1]
      %v389 = vld [vmem:[%s357 + $0x7] sm:$0x1]
      %v390 = vld [vmem:[#allocation2] sm:$0xff]
      %v391 = vld [vmem:[#allocation2 + $0x8] sm:$0xff]
      %v392 = vld [vmem:[#allocation3] sm:$0xff]
      %vm393 = vcmask 261120
      %v394 = vsel %vm393, %v390, 0.0
      %395 = vadd.xlane.f32.xlu0 %v394
      %v396 = vpop.xlane.xlu0 %395
      %v397 = vsel %vm393, %v391, 0.0
      %398 = vadd.xlane.f32.xlu0 %v397
      %v399 = vpop.xlane.xlu0 %398
      %v400 = vrcp.pop 32.0
      %v401 = vmul.f32 %v396, %v400
      %v402 = vmul.f32 %v399, %v400
      %v403 = vsub.f32 %v390, %v401
      %v404 = vsub.f32 %v391, %v402
      %v405 = vmul.f32 %v403, %v403
      %v406 = vmul.f32 %v404, %v404
      %v407 = vsel %vm393, %v405, 0.0
      %408 = vadd.xlane.f32.xlu0 %v407
      %v409 = vpop.xlane.xlu0 %408
      %v410 = vsel %vm393, %v406, 0.0
      %411 = vadd.xlane.f32.xlu0 %v410
      %v412 = vpop.xlane.xlu0 %411
      %v413 = vmul.f32 %v409, %v400
      %v414 = vmul.f32 %v412, %v400
      %v415 = vadd.f32 %v413, 1e-05
      %v416 = vadd.f32 %v414, 1e-05
      %v417 = vrsqrt.pop %v415
      %v418 = vrsqrt.pop %v416
      %v419 = vmul.f32 %v403, %v417
      %v420 = vmul.f32 %v404, %v418
      %v421 = vlaneseq
      %v422 = vshrl.u32 %v421, 7
      %v423 = vsub.s32 0, %v422
      %v424 = vrot.slane %v384, %v423
      %v425 = vmul.f32 %v419, %v424
      %v426 = vmul.f32 %v420, %v424
      %v427 = vlaneseq
      %v428 = vshrl.u32 %v427, 7
      %v429 = vsub.s32 0, %v428
      %v430 = vrot.slane %v385, %v429
      %v431 = vadd.f32 %v425, %v430
      %v432 = vadd.f32 %v426, %v430
      %v433 = vpack.c.bf16 %v432, %v431
      %v434 = vld [vmem:[%s338] sm:$0xf]
      %v435 = vld [vmem:[%s338 + $0x4] sm:$0xf]
      %v436 = vld [vmem:[%s338 + $0x8] sm:$0xf]
      %v437 = vld [vmem:[%s338 + $0xc] sm:$0xf]
      %v438 = vlaneseq
      %v439 = vshrl.u32 %v438, 7
      %v440 = vsub.s32 0, %v439
      %v441 = vrot.slane %v382, %v440
      %v446 = vunpack.c.l.b16 %v434
      %v447 = vunpack.c.l.b16 %v435
      %v448 = vunpack.c.l.b16 %v436
      %v449 = vunpack.c.l.b16 %v437
      %v450 = vpack.c.b16 %v447, %v446
      %v451 = vpack.c.b16 %v449, %v448
      %v455 = vsel %vm393, %v433, 0
      %457 = vmatprep.subr.bf16.mxu0 0
      %458 = vmatpush1.bf16.msra.mxu0 0
      %459 = vmatprep.subr.bf16.mxu0 0
      %460 = vmatpush1.bf16.msra.mxu0 0
      %461 = vmatprep.subr.bf16.mxu0 0
      %462 = vmatpush1.bf16.msra.mxu0 0
      %463 = vmatprep.subr.bf16.mxu0 0
      %464 = vmatpush1.bf16.msra.mxu0 0
      %465 = vmatprep.subr.bf16.mxu0 0
      %466 = vmatpush1.bf16.msra.mxu0 0
      %467 = vmatprep.subr.bf16.mxu0 0
      %468 = vmatpush1.bf16.msra.mxu0 0
      %469 = vmatprep.subr.bf16.mxu0 0
      %470 = vmatpush1.bf16.msra.mxu0 %v451
      %471 = vmatprep.subr.bf16.mxu0 0
      %472 = vmatpush1.bf16.msra.mxu0 %v450
      %473 = vmatprep.subr.bf16.mxu0 0
      %474 = vmatpush2.bf16.msra.mxu0 0
      %475 = vmatprep.subr.bf16.mxu0 0
      %476 = vmatpush2.bf16.msra.mxu0 0
      %477 = vmatprep.subr.bf16.mxu0 0
      %478 = vmatpush2.bf16.msra.mxu0 0
      %479 = vmatprep.subr.bf16.mxu0 0
      %480 = vmatpush2.bf16.msra.mxu0 0
      %481 = vmatprep.subr.bf16.mxu0 0
      %482 = vmatpush2.bf16.msra.mxu0 0
      %483 = vmatprep.subr.bf16.mxu0 0
      %484 = vmatpush2.bf16.msra.mxu0 0
      %485 = vmatprep.subr.bf16.mxu0 0
      %486 = vmatpush2.bf16.msra.mxu0 0
      %487 = vmatprep.subr.bf16.mxu0 0
      %488 = vmatpush2.bf16.msra.mxu0 0
      %489 = vmatprep.mubr.bf16.mxu0 0
      %490 = vmatmul.mubr.bf16.gmra.mxu0 %v455
      %v491 = vpop.f32.mrf.mxu0
      %v492 = vadd.f32 %v441, %v491
      %v493 = vpop.f32.mrf.mxu0
      %v494 = vpop.f32.mrf.mxu0
      %v495 = vadd.f32 %v441, %v494
      %v496 = vpop.f32.mrf.mxu0
      %497 = vdwg.mxu0
      %v498 = vmul.f32 %v492, 0.25
      %v499 = vmul.f32 %v495, 0.25
      %501 = vrot.lane.b32.xlu0 %v492, 96
      %v502 = vpop.permute.xlu0 %501
      %vm503 = vcmask 130048
      %v505 = vsel %vm503, %v498, 0
      %v507 = vsel %vm503, %v502, 0
      %509 = vmatprep.subr.mxu0 0.0
      %510 = vmatpush1.xpose.msra.mxu0 0.0
      %511 = vmatprep.subr.mxu0 0.0
      %512 = vmatpush1.xpose.msra.mxu0 0.0
      %513 = vmatprep.subr.mxu0 0.0
      %514 = vmatpush1.xpose.msra.mxu0 0.0
      %515 = vmatprep.subr.mxu0 0.0
      %516 = vmatpush1.xpose.msra.mxu0 0.0
      %517 = vmatprep.subr.mxu0 0.0
      %518 = vmatpush1.xpose.msra.mxu0 0.0
      %519 = vmatprep.subr.mxu0 0.0
      %520 = vmatpush1.xpose.msra.mxu0 0.0
      %521 = vmatprep.subr.mxu0 0.0
      %522 = vmatpush1.xpose.msra.mxu0 0.0
      %523 = vmatprep.subr.mxu0 0.0
      %524 = vmatpush1.xpose.msra.mxu0 0.0
      %525 = vmatprep.subr.mxu0 0.0
      %526 = vmatpush1.xpose.msra.mxu0 0.0
      %527 = vmatprep.subr.mxu0 0.0
      %528 = vmatpush1.xpose.msra.mxu0 0.0
      %529 = vmatprep.subr.mxu0 0.0
      %530 = vmatpush1.xpose.msra.mxu0 0.0
      %531 = vmatprep.subr.mxu0 0.0
      %532 = vmatpush1.xpose.msra.mxu0 0.0
      %533 = vmatprep.subr.mxu0 0.0
      %534 = vmatpush1.xpose.msra.mxu0 0.0
      %535 = vmatprep.subr.mxu0 0.0
      %536 = vmatpush1.xpose.msra.mxu0 0.0
      %537 = vmatprep.subr.mxu0 0.0
      %538 = vmatpush1.xpose.msra.mxu0 0.0
      %539 = vmatprep.subr.mxu0 0.0
      %540 = vmatpush1.xpose.msra.mxu0 %v507
      %541 = vmatprep.subr.mxu0 0.0
      %542 = vmatpush2.xpose.msra.mxu0 0.0
      %543 = vmatprep.subr.mxu0 0.0
      %544 = vmatpush2.xpose.msra.mxu0 0.0
      %545 = vmatprep.subr.mxu0 0.0
      %546 = vmatpush2.xpose.msra.mxu0 0.0
      %547 = vmatprep.subr.mxu0 0.0
      %548 = vmatpush2.xpose.msra.mxu0 0.0
      %549 = vmatprep.subr.mxu0 0.0
      %550 = vmatpush2.xpose.msra.mxu0 0.0
      %551 = vmatprep.subr.mxu0 0.0
      %552 = vmatpush2.xpose.msra.mxu0 0.0
      %553 = vmatprep.subr.mxu0 0.0
      %554 = vmatpush2.xpose.msra.mxu0 0.0
      %555 = vmatprep.subr.mxu0 0.0
      %556 = vmatpush2.xpose.msra.mxu0 0.0
      %557 = vmatprep.subr.mxu0 0.0
      %558 = vmatpush2.xpose.msra.mxu0 0.0
      %559 = vmatprep.subr.mxu0 0.0
      %560 = vmatpush2.xpose.msra.mxu0 0.0
      %561 = vmatprep.subr.mxu0 0.0
      %562 = vmatpush2.xpose.msra.mxu0 0.0
      %563 = vmatprep.subr.mxu0 0.0
      %564 = vmatpush2.xpose.msra.mxu0 0.0
      %565 = vmatprep.subr.mxu0 0.0
      %566 = vmatpush2.xpose.msra.mxu0 0.0
      %567 = vmatprep.subr.mxu0 0.0
      %568 = vmatpush2.xpose.msra.mxu0 0.0
      %569 = vmatprep.subr.mxu0 0.0
      %570 = vmatpush2.xpose.msra.mxu0 0.0
      %571 = vmatprep.subr.mxu0 0.0
      %572 = vmatpush2.xpose.msra.mxu0 0.0
      %573 = vmatprep.mubr.f32.mxu0 0.0
      %574 = vmatmul.mubr.f32.gmra.mxu0 %v505
      %v575 = vpop.f32.mrf.mxu0
      %v576 = vadd.f32 %v392, %v575
      %v577 = vpop.f32.mrf.mxu0
      %578 = vdwg.mxu0
      %580 = vrot.lane.b32.xlu0 %v495, 96
      %v581 = vpop.permute.xlu0 %580
      %v583 = vsel %vm503, %v499, 0
      %v585 = vsel %vm503, %v581, 0
      %587 = vmatprep.subr.mxu0 0.0
      %588 = vmatpush1.xpose.msra.mxu0 0.0
      %589 = vmatprep.subr.mxu0 0.0
      %590 = vmatpush1.xpose.msra.mxu0 0.0
      %591 = vmatprep.subr.mxu0 0.0
      %592 = vmatpush1.xpose.msra.mxu0 0.0
      %593 = vmatprep.subr.mxu0 0.0
      %594 = vmatpush1.xpose.msra.mxu0 0.0
      %595 = vmatprep.subr.mxu0 0.0
      %596 = vmatpush1.xpose.msra.mxu0 0.0
      %597 = vmatprep.subr.mxu0 0.0
      %598 = vmatpush1.xpose.msra.mxu0 0.0
      %599 = vmatprep.subr.mxu0 0.0
      %600 = vmatpush1.xpose.msra.mxu0 0.0
      %601 = vmatprep.subr.mxu0 0.0
      %602 = vmatpush1.xpose.msra.mxu0 0.0
      %603 = vmatprep.subr.mxu0 0.0
      %604 = vmatpush1.xpose.msra.mxu0 0.0
      %605 = vmatprep.subr.mxu0 0.0
      %606 = vmatpush1.xpose.msra.mxu0 0.0
      %607 = vmatprep.subr.mxu0 0.0
      %608 = vmatpush1.xpose.msra.mxu0 0.0
      %609 = vmatprep.subr.mxu0 0.0
      %610 = vmatpush1.xpose.msra.mxu0 0.0
      %611 = vmatprep.subr.mxu0 0.0
      %612 = vmatpush1.xpose.msra.mxu0 0.0
      %613 = vmatprep.subr.mxu0 0.0
      %614 = vmatpush1.xpose.msra.mxu0 0.0
      %615 = vmatprep.subr.mxu0 0.0
      %616 = vmatpush1.xpose.msra.mxu0 0.0
      %617 = vmatprep.subr.mxu0 0.0
      %618 = vmatpush1.xpose.msra.mxu0 %v585
      %619 = vmatprep.subr.mxu0 0.0
      %620 = vmatpush2.xpose.msra.mxu0 0.0
      %621 = vmatprep.subr.mxu0 0.0
      %622 = vmatpush2.xpose.msra.mxu0 0.0
      %623 = vmatprep.subr.mxu0 0.0
      %624 = vmatpush2.xpose.msra.mxu0 0.0
      %625 = vmatprep.subr.mxu0 0.0
      %626 = vmatpush2.xpose.msra.mxu0 0.0
      %627 = vmatprep.subr.mxu0 0.0
      %628 = vmatpush2.xpose.msra.mxu0 0.0
      %629 = vmatprep.subr.mxu0 0.0
      %630 = vmatpush2.xpose.msra.mxu0 0.0
      %631 = vmatprep.subr.mxu0 0.0
      %632 = vmatpush2.xpose.msra.mxu0 0.0
      %633 = vmatprep.subr.mxu0 0.0
      %634 = vmatpush2.xpose.msra.mxu0 0.0
      %635 = vmatprep.subr.mxu0 0.0
      %636 = vmatpush2.xpose.msra.mxu0 0.0
      %637 = vmatprep.subr.mxu0 0.0
      %638 = vmatpush2.xpose.msra.mxu0 0.0
      %639 = vmatprep.subr.mxu0 0.0
      %640 = vmatpush2.xpose.msra.mxu0 0.0
      %641 = vmatprep.subr.mxu0 0.0
      %642 = vmatpush2.xpose.msra.mxu0 0.0
      %643 = vmatprep.subr.mxu0 0.0
      %644 = vmatpush2.xpose.msra.mxu0 0.0
      %645 = vmatprep.subr.mxu0 0.0
      %646 = vmatpush2.xpose.msra.mxu0 0.0
      %647 = vmatprep.subr.mxu0 0.0
      %648 = vmatpush2.xpose.msra.mxu0 0.0
      %649 = vmatprep.subr.mxu0 0.0
      %650 = vmatpush2.xpose.msra.mxu0 0.0
      %651 = vmatprep.mubr.f32.mxu0 0.0
      %652 = vmatmul.mubr.f32.gmra.mxu0 %v583
      %v653 = vpop.f32.mrf.mxu0
      %v654 = vadd.f32 %v392, %v653
      %v655 = vpop.f32.mrf.mxu0
      %656 = vdwg.mxu0
      %vm657 = vcmask 64512
      %v658 = vsel %vm657, %v576, -inf
      %659 = vmax.xlane.f32.xlu0 %v658
      %v660 = vpop.xlane.xlu0 %659
      %v661 = vsel %vm657, %v654, -inf
      %662 = vmax.xlane.f32.xlu0 %v661
      %v663 = vpop.xlane.xlu0 %662
      %v664 = vsub.f32 %v576, %v660
      %v665 = vsub.f32 %v654, %v663
      %v666 = vmul.f32 %v664, 1.442695
      %v667 = vpow.pop %v666
      %v668 = vmul.f32 %v665, 1.442695
      %v669 = vpow.pop %v668
      %v670 = vsel %vm657, %v667, 0.0
      %671 = vadd.xlane.f32.xlu0 %v670
      %v672 = vpop.xlane.xlu0 %671
      %v673 = vsel %vm657, %v669, 0.0
      %674 = vadd.xlane.f32.xlu0 %v673
      %v675 = vpop.xlane.xlu0 %674
      %v676 = vrcp.pop %v672
      %v677 = vmul.f32 %v667, %v676
      %v678 = vrcp.pop %v675
      %v679 = vmul.f32 %v669, %v678
      %680 = vrot.lane.b32.xlu0 %v492, 64
      %v681 = vpop.permute.xlu0 %680
      %v684 = vsel %vm657, %v677, 0
      %686 = vmatprep.subr.mxu0 0.0
      %687 = vmatpush1.msra.mxu0 0.0
      %688 = vmatprep.subr.mxu0 0.0
      %689 = vmatpush1.msra.mxu0 0.0
      %690 = vmatprep.subr.mxu0 0.0
      %691 = vmatpush1.msra.mxu0 0.0
      %692 = vmatprep.subr.mxu0 0.0
      %693 = vmatpush1.msra.mxu0 0.0
      %694 = vmatprep.subr.mxu0 0.0
      %695 = vmatpush1.msra.mxu0 0.0
      %696 = vmatprep.subr.mxu0 0.0
      %697 = vmatpush1.msra.mxu0 0.0
      %698 = vmatprep.subr.mxu0 0.0
      %699 = vmatpush1.msra.mxu0 0.0
      %700 = vmatprep.subr.mxu0 0.0
      %701 = vmatpush1.msra.mxu0 0.0
      %702 = vmatprep.subr.mxu0 0.0
      %703 = vmatpush1.msra.mxu0 0.0
      %704 = vmatprep.subr.mxu0 0.0
      %705 = vmatpush1.msra.mxu0 0.0
      %706 = vmatprep.subr.mxu0 0.0
      %707 = vmatpush1.msra.mxu0 0.0
      %708 = vmatprep.subr.mxu0 0.0
      %709 = vmatpush1.msra.mxu0 0.0
      %710 = vmatprep.subr.mxu0 0.0
      %711 = vmatpush1.msra.mxu0 0.0
      %712 = vmatprep.subr.mxu0 0.0
      %713 = vmatpush1.msra.mxu0 0.0
      %714 = vmatprep.subr.mxu0 0.0
      %715 = vmatpush1.msra.mxu0 0.0
      %716 = vmatprep.subr.mxu0 0.0
      %717 = vmatpush1.msra.mxu0 %v681
      %718 = vmatprep.subr.mxu0 0.0
      %719 = vmatpush2.msra.mxu0 0.0
      %720 = vmatprep.subr.mxu0 0.0
      %721 = vmatpush2.msra.mxu0 0.0
      %722 = vmatprep.subr.mxu0 0.0
      %723 = vmatpush2.msra.mxu0 0.0
      %724 = vmatprep.subr.mxu0 0.0
      %725 = vmatpush2.msra.mxu0 0.0
      %726 = vmatprep.subr.mxu0 0.0
      %727 = vmatpush2.msra.mxu0 0.0
      %728 = vmatprep.subr.mxu0 0.0
      %729 = vmatpush2.msra.mxu0 0.0
      %730 = vmatprep.subr.mxu0 0.0
      %731 = vmatpush2.msra.mxu0 0.0
      %732 = vmatprep.subr.mxu0 0.0
      %733 = vmatpush2.msra.mxu0 0.0
      %734 = vmatprep.subr.mxu0 0.0
      %735 = vmatpush2.msra.mxu0 0.0
      %736 = vmatprep.subr.mxu0 0.0
      %737 = vmatpush2.msra.mxu0 0.0
      %738 = vmatprep.subr.mxu0 0.0
      %739 = vmatpush2.msra.mxu0 0.0
      %740 = vmatprep.subr.mxu0 0.0
      %741 = vmatpush2.msra.mxu0 0.0
      %742 = vmatprep.subr.mxu0 0.0
      %743 = vmatpush2.msra.mxu0 0.0
      %744 = vmatprep.subr.mxu0 0.0
      %745 = vmatpush2.msra.mxu0 0.0
      %746 = vmatprep.subr.mxu0 0.0
      %747 = vmatpush2.msra.mxu0 0.0
      %748 = vmatprep.subr.mxu0 0.0
      %749 = vmatpush2.msra.mxu0 0.0
      %750 = vmatprep.mubr.f32.mxu0 0.0
      %751 = vmatmul.mubr.f32.gmra.mxu0 %v684
      %v752 = vpop.f32.mrf.mxu0
      %v753 = vadd.f32 0.0, %v752
      %v754 = vpop.f32.mrf.mxu0
      %755 = vdwg.mxu0
      %756 = vrot.lane.b32.xlu0 %v495, 64
      %v757 = vpop.permute.xlu0 %756
      %v760 = vsel %vm657, %v679, 0
      %762 = vmatprep.subr.mxu0 0.0
      %763 = vmatpush1.msra.mxu0 0.0
      %764 = vmatprep.subr.mxu0 0.0
      %765 = vmatpush1.msra.mxu0 0.0
      %766 = vmatprep.subr.mxu0 0.0
      %767 = vmatpush1.msra.mxu0 0.0
      %768 = vmatprep.subr.mxu0 0.0
      %769 = vmatpush1.msra.mxu0 0.0
      %770 = vmatprep.subr.mxu0 0.0
      %771 = vmatpush1.msra.mxu0 0.0
      %772 = vmatprep.subr.mxu0 0.0
      %773 = vmatpush1.msra.mxu0 0.0
      %774 = vmatprep.subr.mxu0 0.0
      %775 = vmatpush1.msra.mxu0 0.0
      %776 = vmatprep.subr.mxu0 0.0
      %777 = vmatpush1.msra.mxu0 0.0
      %778 = vmatprep.subr.mxu0 0.0
      %779 = vmatpush1.msra.mxu0 0.0
      %780 = vmatprep.subr.mxu0 0.0
      %781 = vmatpush1.msra.mxu0 0.0
      %782 = vmatprep.subr.mxu0 0.0
      %783 = vmatpush1.msra.mxu0 0.0
      %784 = vmatprep.subr.mxu0 0.0
      %785 = vmatpush1.msra.mxu0 0.0
      %786 = vmatprep.subr.mxu0 0.0
      %787 = vmatpush1.msra.mxu0 0.0
      %788 = vmatprep.subr.mxu0 0.0
      %789 = vmatpush1.msra.mxu0 0.0
      %790 = vmatprep.subr.mxu0 0.0
      %791 = vmatpush1.msra.mxu0 0.0
      %792 = vmatprep.subr.mxu0 0.0
      %793 = vmatpush1.msra.mxu0 %v757
      %794 = vmatprep.subr.mxu0 0.0
      %795 = vmatpush2.msra.mxu0 0.0
      %796 = vmatprep.subr.mxu0 0.0
      %797 = vmatpush2.msra.mxu0 0.0
      %798 = vmatprep.subr.mxu0 0.0
      %799 = vmatpush2.msra.mxu0 0.0
      %800 = vmatprep.subr.mxu0 0.0
      %801 = vmatpush2.msra.mxu0 0.0
      %802 = vmatprep.subr.mxu0 0.0
      %803 = vmatpush2.msra.mxu0 0.0
      %804 = vmatprep.subr.mxu0 0.0
      %805 = vmatpush2.msra.mxu0 0.0
      %806 = vmatprep.subr.mxu0 0.0
      %807 = vmatpush2.msra.mxu0 0.0
      %808 = vmatprep.subr.mxu0 0.0
      %809 = vmatpush2.msra.mxu0 0.0
      %810 = vmatprep.subr.mxu0 0.0
      %811 = vmatpush2.msra.mxu0 0.0
      %812 = vmatprep.subr.mxu0 0.0
      %813 = vmatpush2.msra.mxu0 0.0
      %814 = vmatprep.subr.mxu0 0.0
      %815 = vmatpush2.msra.mxu0 0.0
      %816 = vmatprep.subr.mxu0 0.0
      %817 = vmatpush2.msra.mxu0 0.0
      %818 = vmatprep.subr.mxu0 0.0
      %819 = vmatpush2.msra.mxu0 0.0
      %820 = vmatprep.subr.mxu0 0.0
      %821 = vmatpush2.msra.mxu0 0.0
      %822 = vmatprep.subr.mxu0 0.0
      %823 = vmatpush2.msra.mxu0 0.0
      %824 = vmatprep.subr.mxu0 0.0
      %825 = vmatpush2.msra.mxu0 0.0
      %826 = vmatprep.mubr.f32.mxu0 0.0
      %827 = vmatmul.mubr.f32.gmra.mxu0 %v760
      %v828 = vpop.f32.mrf.mxu0
      %v829 = vadd.f32 0.0, %v828
      %v830 = vpop.f32.mrf.mxu0
      %831 = vdwg.mxu0
      %v832 = vpack.c.bf16 %v829, %v753
      %v833 = vld [vmem:[%s343] sm:$0xf]
      %v834 = vld [vmem:[%s343 + $0x4] sm:$0xf]
      %835 = vrot.lane.b32.xlu0 %v498, 112
      %v836 = vpop.permute.xlu0 %835
      %837 = vrot.lane.b32.xlu0 %v492, 80
      %v838 = vpop.permute.xlu0 %837
      %v839 = vsel %vm503, %v836, 0
      %v841 = vsel %vm503, %v838, 0
      %843 = vmatprep.subr.mxu0 0.0
      %844 = vmatpush1.xpose.msra.mxu0 0.0
      %845 = vmatprep.subr.mxu0 0.0
      %846 = vmatpush1.xpose.msra.mxu0 0.0
      %847 = vmatprep.subr.mxu0 0.0
      %848 = vmatpush1.xpose.msra.mxu0 0.0
      %849 = vmatprep.subr.mxu0 0.0
      %850 = vmatpush1.xpose.msra.mxu0 0.0
      %851 = vmatprep.subr.mxu0 0.0
      %852 = vmatpush1.xpose.msra.mxu0 0.0
      %853 = vmatprep.subr.mxu0 0.0
      %854 = vmatpush1.xpose.msra.mxu0 0.0
      %855 = vmatprep.subr.mxu0 0.0
      %856 = vmatpush1.xpose.msra.mxu0 0.0
      %857 = vmatprep.subr.mxu0 0.0
      %858 = vmatpush1.xpose.msra.mxu0 0.0
      %859 = vmatprep.subr.mxu0 0.0
      %860 = vmatpush1.xpose.msra.mxu0 0.0
      %861 = vmatprep.subr.mxu0 0.0
      %862 = vmatpush1.xpose.msra.mxu0 0.0
      %863 = vmatprep.subr.mxu0 0.0
      %864 = vmatpush1.xpose.msra.mxu0 0.0
      %865 = vmatprep.subr.mxu0 0.0
      %866 = vmatpush1.xpose.msra.mxu0 0.0
      %867 = vmatprep.subr.mxu0 0.0
      %868 = vmatpush1.xpose.msra.mxu0 0.0
      %869 = vmatprep.subr.mxu0 0.0
      %870 = vmatpush1.xpose.msra.mxu0 0.0
      %871 = vmatprep.subr.mxu0 0.0
      %872 = vmatpush1.xpose.msra.mxu0 0.0
      %873 = vmatprep.subr.mxu0 0.0
      %874 = vmatpush1.xpose.msra.mxu0 %v841
      %875 = vmatprep.subr.mxu0 0.0
      %876 = vmatpush2.xpose.msra.mxu0 0.0
      %877 = vmatprep.subr.mxu0 0.0
      %878 = vmatpush2.xpose.msra.mxu0 0.0
      %879 = vmatprep.subr.mxu0 0.0
      %880 = vmatpush2.xpose.msra.mxu0 0.0
      %881 = vmatprep.subr.mxu0 0.0
      %882 = vmatpush2.xpose.msra.mxu0 0.0
      %883 = vmatprep.subr.mxu0 0.0
      %884 = vmatpush2.xpose.msra.mxu0 0.0
      %885 = vmatprep.subr.mxu0 0.0
      %886 = vmatpush2.xpose.msra.mxu0 0.0
      %887 = vmatprep.subr.mxu0 0.0
      %888 = vmatpush2.xpose.msra.mxu0 0.0
      %889 = vmatprep.subr.mxu0 0.0
      %890 = vmatpush2.xpose.msra.mxu0 0.0
      %891 = vmatprep.subr.mxu0 0.0
      %892 = vmatpush2.xpose.msra.mxu0 0.0
      %893 = vmatprep.subr.mxu0 0.0
      %894 = vmatpush2.xpose.msra.mxu0 0.0
      %895 = vmatprep.subr.mxu0 0.0
      %896 = vmatpush2.xpose.msra.mxu0 0.0
      %897 = vmatprep.subr.mxu0 0.0
      %898 = vmatpush2.xpose.msra.mxu0 0.0
      %899 = vmatprep.subr.mxu0 0.0
      %900 = vmatpush2.xpose.msra.mxu0 0.0
      %901 = vmatprep.subr.mxu0 0.0
      %902 = vmatpush2.xpose.msra.mxu0 0.0
      %903 = vmatprep.subr.mxu0 0.0
      %904 = vmatpush2.xpose.msra.mxu0 0.0
      %905 = vmatprep.subr.mxu0 0.0
      %906 = vmatpush2.xpose.msra.mxu0 0.0
      %907 = vmatprep.mubr.f32.mxu0 0.0
      %908 = vmatmul.mubr.f32.gmra.mxu0 %v839
      %v909 = vpop.f32.mrf.mxu0
      %v910 = vadd.f32 %v392, %v909
      %v911 = vpop.f32.mrf.mxu0
      %912 = vdwg.mxu0
      %913 = vrot.lane.b32.xlu0 %v499, 112
      %v914 = vpop.permute.xlu0 %913
      %915 = vrot.lane.b32.xlu0 %v495, 80
      %v916 = vpop.permute.xlu0 %915
      %v917 = vsel %vm503, %v914, 0
      %v919 = vsel %vm503, %v916, 0
      %921 = vmatprep.subr.mxu0 0.0
      %922 = vmatpush1.xpose.msra.mxu0 0.0
      %923 = vmatprep.subr.mxu0 0.0
      %924 = vmatpush1.xpose.msra.mxu0 0.0
      %925 = vmatprep.subr.mxu0 0.0
      %926 = vmatpush1.xpose.msra.mxu0 0.0
      %927 = vmatprep.subr.mxu0 0.0
      %928 = vmatpush1.xpose.msra.mxu0 0.0
      %929 = vmatprep.subr.mxu0 0.0
      %930 = vmatpush1.xpose.msra.mxu0 0.0
      %931 = vmatprep.subr.mxu0 0.0
      %932 = vmatpush1.xpose.msra.mxu0 0.0
      %933 = vmatprep.subr.mxu0 0.0
      %934 = vmatpush1.xpose.msra.mxu0 0.0
      %935 = vmatprep.subr.mxu0 0.0
      %936 = vmatpush1.xpose.msra.mxu0 0.0
      %937 = vmatprep.subr.mxu0 0.0
      %938 = vmatpush1.xpose.msra.mxu0 0.0
      %939 = vmatprep.subr.mxu0 0.0
      %940 = vmatpush1.xpose.msra.mxu0 0.0
      %941 = vmatprep.subr.mxu0 0.0
      %942 = vmatpush1.xpose.msra.mxu0 0.0
      %943 = vmatprep.subr.mxu0 0.0
      %944 = vmatpush1.xpose.msra.mxu0 0.0
      %945 = vmatprep.subr.mxu0 0.0
      %946 = vmatpush1.xpose.msra.mxu0 0.0
      %947 = vmatprep.subr.mxu0 0.0
      %948 = vmatpush1.xpose.msra.mxu0 0.0
      %949 = vmatprep.subr.mxu0 0.0
      %950 = vmatpush1.xpose.msra.mxu0 0.0
      %951 = vmatprep.subr.mxu0 0.0
      %952 = vmatpush1.xpose.msra.mxu0 %v919
      %953 = vmatprep.subr.mxu0 0.0
      %954 = vmatpush2.xpose.msra.mxu0 0.0
      %955 = vmatprep.subr.mxu0 0.0
      %956 = vmatpush2.xpose.msra.mxu0 0.0
      %957 = vmatprep.subr.mxu0 0.0
      %958 = vmatpush2.xpose.msra.mxu0 0.0
      %959 = vmatprep.subr.mxu0 0.0
      %960 = vmatpush2.xpose.msra.mxu0 0.0
      %961 = vmatprep.subr.mxu0 0.0
      %962 = vmatpush2.xpose.msra.mxu0 0.0
      %963 = vmatprep.subr.mxu0 0.0
      %964 = vmatpush2.xpose.msra.mxu0 0.0
      %965 = vmatprep.subr.mxu0 0.0
      %966 = vmatpush2.xpose.msra.mxu0 0.0
      %967 = vmatprep.subr.mxu0 0.0
      %968 = vmatpush2.xpose.msra.mxu0 0.0
      %969 = vmatprep.subr.mxu0 0.0
      %970 = vmatpush2.xpose.msra.mxu0 0.0
      %971 = vmatprep.subr.mxu0 0.0
      %972 = vmatpush2.xpose.msra.mxu0 0.0
      %973 = vmatprep.subr.mxu0 0.0
      %974 = vmatpush2.xpose.msra.mxu0 0.0
      %975 = vmatprep.subr.mxu0 0.0
      %976 = vmatpush2.xpose.msra.mxu0 0.0
      %977 = vmatprep.subr.mxu0 0.0
      %978 = vmatpush2.xpose.msra.mxu0 0.0
      %979 = vmatprep.subr.mxu0 0.0
      %980 = vmatpush2.xpose.msra.mxu0 0.0
      %981 = vmatprep.subr.mxu0 0.0
      %982 = vmatpush2.xpose.msra.mxu0 0.0
      %983 = vmatprep.subr.mxu0 0.0
      %984 = vmatpush2.xpose.msra.mxu0 0.0
      %985 = vmatprep.mubr.f32.mxu0 0.0
      %986 = vmatmul.mubr.f32.gmra.mxu0 %v917
      %v987 = vpop.f32.mrf.mxu0
      %v988 = vadd.f32 %v392, %v987
      %v989 = vpop.f32.mrf.mxu0
      %990 = vdwg.mxu0
      %v991 = vsel %vm657, %v910, -inf
      %992 = vmax.xlane.f32.xlu0 %v991
      %v993 = vpop.xlane.xlu0 %992
      %v994 = vsel %vm657, %v988, -inf
      %995 = vmax.xlane.f32.xlu0 %v994
      %v996 = vpop.xlane.xlu0 %995
      %v997 = vsub.f32 %v910, %v993
      %v998 = vsub.f32 %v988, %v996
      %v999 = vmul.f32 %v997, 1.442695
      %v1000 = vpow.pop %v999
      %v1001 = vmul.f32 %v998, 1.442695
      %v1002 = vpow.pop %v1001
      %v1003 = vsel %vm657, %v1000, 0.0
      %1004 = vadd.xlane.f32.xlu0 %v1003
      %v1005 = vpop.xlane.xlu0 %1004
      %v1006 = vsel %vm657, %v1002, 0.0
      %1007 = vadd.xlane.f32.xlu0 %v1006
      %v1008 = vpop.xlane.xlu0 %1007
      %v1009 = vrcp.pop %v1005
      %v1010 = vmul.f32 %v1000, %v1009
      %v1011 = vrcp.pop %v1008
      %v1012 = vmul.f32 %v1002, %v1011
      %1013 = vrot.lane.b32.xlu0 %v492, 48
      %v1014 = vpop.permute.xlu0 %1013
      %v1017 = vsel %vm657, %v1010, 0
      %1019 = vmatprep.subr.mxu0 0.0
      %1020 = vmatpush1.msra.mxu0 0.0
      %1021 = vmatprep.subr.mxu0 0.0
      %1022 = vmatpush1.msra.mxu0 0.0
      %1023 = vmatprep.subr.mxu0 0.0
      %1024 = vmatpush1.msra.mxu0 0.0
      %1025 = vmatprep.subr.mxu0 0.0
      %1026 = vmatpush1.msra.mxu0 0.0
      %1027 = vmatprep.subr.mxu0 0.0
      %1028 = vmatpush1.msra.mxu0 0.0
      %1029 = vmatprep.subr.mxu0 0.0
      %1030 = vmatpush1.msra.mxu0 0.0
      %1031 = vmatprep.subr.mxu0 0.0
      %1032 = vmatpush1.msra.mxu0 0.0
      %1033 = vmatprep.subr.mxu0 0.0
      %1034 = vmatpush1.msra.mxu0 0.0
      %1035 = vmatprep.subr.mxu0 0.0
      %1036 = vmatpush1.msra.mxu0 0.0
      %1037 = vmatprep.subr.mxu0 0.0
      %1038 = vmatpush1.msra.mxu0 0.0
      %1039 = vmatprep.subr.mxu0 0.0
      %1040 = vmatpush1.msra.mxu0 0.0
      %1041 = vmatprep.subr.mxu0 0.0
      %1042 = vmatpush1.msra.mxu0 0.0
      %1043 = vmatprep.subr.mxu0 0.0
      %1044 = vmatpush1.msra.mxu0 0.0
      %1045 = vmatprep.subr.mxu0 0.0
      %1046 = vmatpush1.msra.mxu0 0.0
      %1047 = vmatprep.subr.mxu0 0.0
      %1048 = vmatpush1.msra.mxu0 0.0
      %1049 = vmatprep.subr.mxu0 0.0
      %1050 = vmatpush1.msra.mxu0 %v1014
      %1051 = vmatprep.subr.mxu0 0.0
      %1052 = vmatpush2.msra.mxu0 0.0
      %1053 = vmatprep.subr.mxu0 0.0
      %1054 = vmatpush2.msra.mxu0 0.0
      %1055 = vmatprep.subr.mxu0 0.0
      %1056 = vmatpush2.msra.mxu0 0.0
      %1057 = vmatprep.subr.mxu0 0.0
      %1058 = vmatpush2.msra.mxu0 0.0
      %1059 = vmatprep.subr.mxu0 0.0
      %1060 = vmatpush2.msra.mxu0 0.0
      %1061 = vmatprep.subr.mxu0 0.0
      %1062 = vmatpush2.msra.mxu0 0.0
      %1063 = vmatprep.subr.mxu0 0.0
      %1064 = vmatpush2.msra.mxu0 0.0
      %1065 = vmatprep.subr.mxu0 0.0
      %1066 = vmatpush2.msra.mxu0 0.0
      %1067 = vmatprep.subr.mxu0 0.0
      %1068 = vmatpush2.msra.mxu0 0.0
      %1069 = vmatprep.subr.mxu0 0.0
      %1070 = vmatpush2.msra.mxu0 0.0
      %1071 = vmatprep.subr.mxu0 0.0
      %1072 = vmatpush2.msra.mxu0 0.0
      %1073 = vmatprep.subr.mxu0 0.0
      %1074 = vmatpush2.msra.mxu0 0.0
      %1075 = vmatprep.subr.mxu0 0.0
      %1076 = vmatpush2.msra.mxu0 0.0
      %1077 = vmatprep.subr.mxu0 0.0
      %1078 = vmatpush2.msra.mxu0 0.0
      %1079 = vmatprep.subr.mxu0 0.0
      %1080 = vmatpush2.msra.mxu0 0.0
      %1081 = vmatprep.subr.mxu0 0.0
      %1082 = vmatpush2.msra.mxu0 0.0
      %1083 = vmatprep.mubr.f32.mxu0 0.0
      %1084 = vmatmul.mubr.f32.gmra.mxu0 %v1017
      %v1085 = vpop.f32.mrf.mxu0
      %v1086 = vadd.f32 0.0, %v1085
      %v1087 = vpop.f32.mrf.mxu0
      %1088 = vdwg.mxu0
      %1089 = vrot.lane.b32.xlu0 %v495, 48
      %v1090 = vpop.permute.xlu0 %1089
      %v1093 = vsel %vm657, %v1012, 0
      %1095 = vmatprep.subr.mxu0 0.0
      %1096 = vmatpush1.msra.mxu0 0.0
      %1097 = vmatprep.subr.mxu0 0.0
      %1098 = vmatpush1.msra.mxu0 0.0
      %1099 = vmatprep.subr.mxu0 0.0
      %1100 = vmatpush1.msra.mxu0 0.0
      %1101 = vmatprep.subr.mxu0 0.0
      %1102 = vmatpush1.msra.mxu0 0.0
      %1103 = vmatprep.subr.mxu0 0.0
      %1104 = vmatpush1.msra.mxu0 0.0
      %1105 = vmatprep.subr.mxu0 0.0
      %1106 = vmatpush1.msra.mxu0 0.0
      %1107 = vmatprep.subr.mxu0 0.0
      %1108 = vmatpush1.msra.mxu0 0.0
      %1109 = vmatprep.subr.mxu0 0.0
      %1110 = vmatpush1.msra.mxu0 0.0
      %1111 = vmatprep.subr.mxu0 0.0
      %1112 = vmatpush1.msra.mxu0 0.0
      %1113 = vmatprep.subr.mxu0 0.0
      %1114 = vmatpush1.msra.mxu0 0.0
      %1115 = vmatprep.subr.mxu0 0.0
      %1116 = vmatpush1.msra.mxu0 0.0
      %1117 = vmatprep.subr.mxu0 0.0
      %1118 = vmatpush1.msra.mxu0 0.0
      %1119 = vmatprep.subr.mxu0 0.0
      %1120 = vmatpush1.msra.mxu0 0.0
      %1121 = vmatprep.subr.mxu0 0.0
      %1122 = vmatpush1.msra.mxu0 0.0
      %1123 = vmatprep.subr.mxu0 0.0
      %1124 = vmatpush1.msra.mxu0 0.0
      %1125 = vmatprep.subr.mxu0 0.0
      %1126 = vmatpush1.msra.mxu0 %v1090
      %1127 = vmatprep.subr.mxu0 0.0
      %1128 = vmatpush2.msra.mxu0 0.0
      %1129 = vmatprep.subr.mxu0 0.0
      %1130 = vmatpush2.msra.mxu0 0.0
      %1131 = vmatprep.subr.mxu0 0.0
      %1132 = vmatpush2.msra.mxu0 0.0
      %1133 = vmatprep.subr.mxu0 0.0
      %1134 = vmatpush2.msra.mxu0 0.0
      %1135 = vmatprep.subr.mxu0 0.0
      %1136 = vmatpush2.msra.mxu0 0.0
      %1137 = vmatprep.subr.mxu0 0.0
      %1138 = vmatpush2.msra.mxu0 0.0
      %1139 = vmatprep.subr.mxu0 0.0
      %1140 = vmatpush2.msra.mxu0 0.0
      %1141 = vmatprep.subr.mxu0 0.0
      %1142 = vmatpush2.msra.mxu0 0.0
      %1143 = vmatprep.subr.mxu0 0.0
      %1144 = vmatpush2.msra.mxu0 0.0
      %1145 = vmatprep.subr.mxu0 0.0
      %1146 = vmatpush2.msra.mxu0 0.0
      %1147 = vmatprep.subr.mxu0 0.0
      %1148 = vmatpush2.msra.mxu0 0.0
      %1149 = vmatprep.subr.mxu0 0.0
      %1150 = vmatpush2.msra.mxu0 0.0
      %1151 = vmatprep.subr.mxu0 0.0
      %1152 = vmatpush2.msra.mxu0 0.0
      %1153 = vmatprep.subr.mxu0 0.0
      %1154 = vmatpush2.msra.mxu0 0.0
      %1155 = vmatprep.subr.mxu0 0.0
      %1156 = vmatpush2.msra.mxu0 0.0
      %1157 = vmatprep.subr.mxu0 0.0
      %1158 = vmatpush2.msra.mxu0 0.0
      %1159 = vmatprep.mubr.f32.mxu0 0.0
      %1160 = vmatmul.mubr.f32.gmra.mxu0 %v1093
      %v1161 = vpop.f32.mrf.mxu0
      %v1162 = vadd.f32 0.0, %v1161
      %v1163 = vpop.f32.mrf.mxu0
      %1164 = vdwg.mxu0
      %v1165 = vpack.c.bf16 %v1162, %v1086
      %v1166 = vld [vmem:[%s343 + $0x8] sm:$0xf]
      %v1167 = vld [vmem:[%s343 + $0xc] sm:$0xf]
      %v1170 = vunpack.c.l.b16 %v1166
      %v1171 = vunpack.c.l.b16 %v1167
      %v1172 = vpack.c.b16 %v1171, %v1170
      %v1175 = vsel %vm503, %v1165, 0
      %1177 = vmatprep.subr.bf16.mxu0 0
      %1178 = vmatpush1.bf16.msra.mxu0 0
      %1179 = vmatprep.subr.bf16.mxu0 0
      %1180 = vmatpush1.bf16.msra.mxu0 0
      %1181 = vmatprep.subr.bf16.mxu0 0
      %1182 = vmatpush1.bf16.msra.mxu0 0
      %1183 = vmatprep.subr.bf16.mxu0 0
      %1184 = vmatpush1.bf16.msra.mxu0 0
      %1185 = vmatprep.subr.bf16.mxu0 0
      %1186 = vmatpush1.bf16.msra.mxu0 0
      %1187 = vmatprep.subr.bf16.mxu0 0
      %1188 = vmatpush1.bf16.msra.mxu0 0
      %1189 = vmatprep.subr.bf16.mxu0 0
      %1190 = vmatpush1.bf16.msra.mxu0 0
      %1191 = vmatprep.subr.bf16.mxu0 0
      %1192 = vmatpush1.bf16.msra.mxu0 %v1172
      %1193 = vmatprep.subr.bf16.mxu0 0
      %1194 = vmatpush2.bf16.msra.mxu0 0
      %1195 = vmatprep.subr.bf16.mxu0 0
      %1196 = vmatpush2.bf16.msra.mxu0 0
      %1197 = vmatprep.subr.bf16.mxu0 0
      %1198 = vmatpush2.bf16.msra.mxu0 0
      %1199 = vmatprep.subr.bf16.mxu0 0
      %1200 = vmatpush2.bf16.msra.mxu0 0
      %1201 = vmatprep.subr.bf16.mxu0 0
      %1202 = vmatpush2.bf16.msra.mxu0 0
      %1203 = vmatprep.subr.bf16.mxu0 0
      %1204 = vmatpush2.bf16.msra.mxu0 0
      %1205 = vmatprep.subr.bf16.mxu0 0
      %1206 = vmatpush2.bf16.msra.mxu0 0
      %1207 = vmatprep.subr.bf16.mxu0 0
      %1208 = vmatpush2.bf16.msra.mxu0 0
      %1209 = vmatprep.mubr.bf16.mxu0 0
      %1210 = vmatmul.mubr.bf16.gmra.mxu0 %v1175
      %v1211 = vpop.f32.mrf.mxu0
      %v1212 = vadd.f32 0.0, %v1211
      %v1213 = vpop.f32.mrf.mxu0
      %v1214 = vpop.f32.mrf.mxu0
      %v1215 = vadd.f32 0.0, %v1214
      %v1216 = vpop.f32.mrf.mxu0
      %1217 = vdwg.mxu0
      %v1220 = vunpack.c.l.b16 %v833
      %v1221 = vunpack.c.l.b16 %v834
      %v1222 = vpack.c.b16 %v1221, %v1220
      %v1225 = vsel %vm503, %v832, 0
      %1227 = vmatprep.subr.bf16.mxu0 0
      %1228 = vmatpush1.bf16.msra.mxu0 0
      %1229 = vmatprep.subr.bf16.mxu0 0
      %1230 = vmatpush1.bf16.msra.mxu0 0
      %1231 = vmatprep.subr.bf16.mxu0 0
      %1232 = vmatpush1.bf16.msra.mxu0 0
      %1233 = vmatprep.subr.bf16.mxu0 0
      %1234 = vmatpush1.bf16.msra.mxu0 0
      %1235 = vmatprep.subr.bf16.mxu0 0
      %1236 = vmatpush1.bf16.msra.mxu0 0
      %1237 = vmatprep.subr.bf16.mxu0 0
      %1238 = vmatpush1.bf16.msra.mxu0 0
      %1239 = vmatprep.subr.bf16.mxu0 0
      %1240 = vmatpush1.bf16.msra.mxu0 0
      %1241 = vmatprep.subr.bf16.mxu0 0
      %1242 = vmatpush1.bf16.msra.mxu0 %v1222
      %1243 = vmatprep.subr.bf16.mxu0 0
      %1244 = vmatpush2.bf16.msra.mxu0 0
      %1245 = vmatprep.subr.bf16.mxu0 0
      %1246 = vmatpush2.bf16.msra.mxu0 0
      %1247 = vmatprep.subr.bf16.mxu0 0
      %1248 = vmatpush2.bf16.msra.mxu0 0
      %1249 = vmatprep.subr.bf16.mxu0 0
      %1250 = vmatpush2.bf16.msra.mxu0 0
      %1251 = vmatprep.subr.bf16.mxu0 0
      %1252 = vmatpush2.bf16.msra.mxu0 0
      %1253 = vmatprep.subr.bf16.mxu0 0
      %1254 = vmatpush2.bf16.msra.mxu0 0
      %1255 = vmatprep.subr.bf16.mxu0 0
      %1256 = vmatpush2.bf16.msra.mxu0 0
      %1257 = vmatprep.subr.bf16.mxu0 0
      %1258 = vmatpush2.bf16.msra.mxu0 0
      %1259 = vmatprep.mubr.bf16.mxu0 0
      %1260 = vmatmul.mubr.bf16.gmra.mxu0 %v1225
      %v1261 = vpop.f32.mrf.mxu0
      %v1262 = vadd.f32 %v1212, %v1261
      %v1263 = vpop.f32.mrf.mxu0
      %v1264 = vpop.f32.mrf.mxu0
      %v1265 = vadd.f32 %v1215, %v1264
      %v1266 = vpop.f32.mrf.mxu0
      %1267 = vdwg.mxu0
      %v1268 = vadd.f32 %v390, %v1262
      %v1269 = vadd.f32 %v391, %v1265
      %v1270 = vlaneseq
      %v1271 = vshrl.u32 %v1270, 7
      %v1272 = vsub.s32 0, %v1271
      %v1273 = vrot.slane %v383, %v1272
      %v1274 = vadd.f32 %v1268, %v1273
      %v1275 = vadd.f32 %v1269, %v1273
      %v1276 = vsel %vm393, %v1274, 0.0
      %1277 = vadd.xlane.f32.xlu0 %v1276
      %v1278 = vpop.xlane.xlu0 %1277
      %v1279 = vsel %vm393, %v1275, 0.0
      %1280 = vadd.xlane.f32.xlu0 %v1279
      %v1281 = vpop.xlane.xlu0 %1280
      %v1282 = vmul.f32 %v1278, %v400
      %v1283 = vmul.f32 %v1281, %v400
      %v1284 = vsub.f32 %v1274, %v1282
      %v1285 = vsub.f32 %v1275, %v1283
      %v1286 = vmul.f32 %v1284, %v1284
      %v1287 = vmul.f32 %v1285, %v1285
      %v1288 = vsel %vm393, %v1286, 0.0
      %1289 = vadd.xlane.f32.xlu0 %v1288
      %v1290 = vpop.xlane.xlu0 %1289
      %v1291 = vsel %vm393, %v1287, 0.0
      %1292 = vadd.xlane.f32.xlu0 %v1291
      %v1293 = vpop.xlane.xlu0 %1292
      %v1294 = vmul.f32 %v1290, %v400
      %v1295 = vmul.f32 %v1293, %v400
      %v1296 = vadd.f32 %v1294, 1e-05
      %v1297 = vadd.f32 %v1295, 1e-05
      %v1298 = vrsqrt.pop %v1296
      %v1299 = vrsqrt.pop %v1297
      %v1300 = vmul.f32 %v1284, %v1298
      %v1301 = vmul.f32 %v1285, %v1299
      %v1302 = vlaneseq
      %v1303 = vshrl.u32 %v1302, 7
      %v1304 = vsub.s32 0, %v1303
      %v1305 = vrot.slane %v386, %v1304
      %v1306 = vmul.f32 %v1300, %v1305
      %v1307 = vmul.f32 %v1301, %v1305
      %v1308 = vlaneseq
      %v1309 = vshrl.u32 %v1308, 7
      %v1310 = vsub.s32 0, %v1309
      %v1311 = vrot.slane %v387, %v1310
      %v1312 = vadd.f32 %v1306, %v1311
      %v1313 = vadd.f32 %v1307, %v1311
      %v1314 = vpack.c.bf16 %v1313, %v1312
      %v1315 = vld [vmem:[%s348] sm:$0xf]
      %v1316 = vld [vmem:[%s348 + $0x4] sm:$0xf]
      %v1317 = vld [vmem:[%s348 + $0x8] sm:$0xf]
      %v1318 = vld [vmem:[%s348 + $0xc] sm:$0xf]
      %v1319 = vlaneseq
      %v1320 = vshrl.u32 %v1319, 7
      %v1321 = vsub.s32 0, %v1320
      %v1322 = vrot.slane %v388, %v1321
      %v1327 = vunpack.c.l.b16 %v1315
      %v1328 = vunpack.c.l.b16 %v1316
      %v1329 = vunpack.c.l.b16 %v1317
      %v1330 = vunpack.c.l.b16 %v1318
      %v1331 = vpack.c.b16 %v1328, %v1327
      %v1332 = vpack.c.b16 %v1330, %v1329
      %v1336 = vsel %vm393, %v1314, 0
      %1338 = vmatprep.subr.bf16.mxu0 0
      %1339 = vmatpush1.bf16.msra.mxu0 0
      %1340 = vmatprep.subr.bf16.mxu0 0
      %1341 = vmatpush1.bf16.msra.mxu0 0
      %1342 = vmatprep.subr.bf16.mxu0 0
      %1343 = vmatpush1.bf16.msra.mxu0 0
      %1344 = vmatprep.subr.bf16.mxu0 0
      %1345 = vmatpush1.bf16.msra.mxu0 0
      %1346 = vmatprep.subr.bf16.mxu0 0
      %1347 = vmatpush1.bf16.msra.mxu0 0
      %1348 = vmatprep.subr.bf16.mxu0 0
      %1349 = vmatpush1.bf16.msra.mxu0 0
      %1350 = vmatprep.subr.bf16.mxu0 0
      %1351 = vmatpush1.bf16.msra.mxu0 %v1332
      %1352 = vmatprep.subr.bf16.mxu0 0
      %1353 = vmatpush1.bf16.msra.mxu0 %v1331
      %1354 = vmatprep.subr.bf16.mxu0 0
      %1355 = vmatpush2.bf16.msra.mxu0 0
      %1356 = vmatprep.subr.bf16.mxu0 0
      %1357 = vmatpush2.bf16.msra.mxu0 0
      %1358 = vmatprep.subr.bf16.mxu0 0
      %1359 = vmatpush2.bf16.msra.mxu0 0
      %1360 = vmatprep.subr.bf16.mxu0 0
      %1361 = vmatpush2.bf16.msra.mxu0 0
      %1362 = vmatprep.subr.bf16.mxu0 0
      %1363 = vmatpush2.bf16.msra.mxu0 0
      %1364 = vmatprep.subr.bf16.mxu0 0
      %1365 = vmatpush2.bf16.msra.mxu0 0
      %1366 = vmatprep.subr.bf16.mxu0 0
      %1367 = vmatpush2.bf16.msra.mxu0 0
      %1368 = vmatprep.subr.bf16.mxu0 0
      %1369 = vmatpush2.bf16.msra.mxu0 0
      %1370 = vmatprep.mubr.bf16.mxu0 0
      %1371 = vmatmul.mubr.bf16.gmra.mxu0 %v1336
      %v1372 = vpop.f32.mrf.mxu0
      %v1373 = vadd.f32 %v1322, %v1372
      %v1374 = vpop.f32.mrf.mxu0
      %v1375 = vpop.f32.mrf.mxu0
      %v1376 = vadd.f32 %v1322, %v1375
      %v1377 = vpop.f32.mrf.mxu0
      %1378 = vdwg.mxu0
      %v1379 = vmax.f32 %v1373, 0.0
      %v1380 = vmax.f32 %v1376, 0.0
      %v1381 = vpack.c.bf16 %v1380, %v1379
      %v1382 = vld [vmem:[%s353] sm:$0xf]
      %v1383 = vld [vmem:[%s353 + $0x4] sm:$0xf]
      %v1384 = vld [vmem:[%s353 + $0x8] sm:$0xf]
      %v1385 = vld [vmem:[%s353 + $0xc] sm:$0xf]
      %v1386 = vld [vmem:[%s353 + $0x10] sm:$0xf]
      %v1387 = vld [vmem:[%s353 + $0x14] sm:$0xf]
      %v1388 = vld [vmem:[%s353 + $0x18] sm:$0xf]
      %v1389 = vld [vmem:[%s353 + $0x1c] sm:$0xf]
      %v1390 = vlaneseq
      %v1391 = vshrl.u32 %v1390, 7
      %v1392 = vsub.s32 0, %v1391
      %v1393 = vrot.slane %v389, %v1392
      %v1402 = vunpack.c.l.b16 %v1382
      %v1403 = vunpack.c.l.b16 %v1383
      %v1404 = vunpack.c.l.b16 %v1384
      %v1405 = vunpack.c.l.b16 %v1385
      %v1406 = vunpack.c.l.b16 %v1386
      %v1407 = vunpack.c.l.b16 %v1387
      %v1408 = vunpack.c.l.b16 %v1388
      %v1409 = vunpack.c.l.b16 %v1389
      %v1410 = vpack.c.b16 %v1403, %v1402
      %v1411 = vpack.c.b16 %v1405, %v1404
      %v1412 = vpack.c.b16 %v1407, %v1406
      %v1413 = vpack.c.b16 %v1409, %v1408
      %vm1418 = vcmask 523264
      %v1420 = vsel %vm1418, %v1381, 0
      %1422 = vmatprep.subr.bf16.mxu0 0
      %1423 = vmatpush1.bf16.msra.mxu0 0
      %1424 = vmatprep.subr.bf16.mxu0 0
      %1425 = vmatpush1.bf16.msra.mxu0 0
      %1426 = vmatprep.subr.bf16.mxu0 0
      %1427 = vmatpush1.bf16.msra.mxu0 0
      %1428 = vmatprep.subr.bf16.mxu0 0
      %1429 = vmatpush1.bf16.msra.mxu0 0
      %1430 = vmatprep.subr.bf16.mxu0 0
      %1431 = vmatpush1.bf16.msra.mxu0 %v1413
      %1432 = vmatprep.subr.bf16.mxu0 0
      %1433 = vmatpush1.bf16.msra.mxu0 %v1412
      %1434 = vmatprep.subr.bf16.mxu0 0
      %1435 = vmatpush1.bf16.msra.mxu0 %v1411
      %1436 = vmatprep.subr.bf16.mxu0 0
      %1437 = vmatpush1.bf16.msra.mxu0 %v1410
      %1438 = vmatprep.subr.bf16.mxu0 0
      %1439 = vmatpush2.bf16.msra.mxu0 0
      %1440 = vmatprep.subr.bf16.mxu0 0
      %1441 = vmatpush2.bf16.msra.mxu0 0
      %1442 = vmatprep.subr.bf16.mxu0 0
      %1443 = vmatpush2.bf16.msra.mxu0 0
      %1444 = vmatprep.subr.bf16.mxu0 0
      %1445 = vmatpush2.bf16.msra.mxu0 0
      %1446 = vmatprep.subr.bf16.mxu0 0
      %1447 = vmatpush2.bf16.msra.mxu0 0
      %1448 = vmatprep.subr.bf16.mxu0 0
      %1449 = vmatpush2.bf16.msra.mxu0 0
      %1450 = vmatprep.subr.bf16.mxu0 0
      %1451 = vmatpush2.bf16.msra.mxu0 0
      %1452 = vmatprep.subr.bf16.mxu0 0
      %1453 = vmatpush2.bf16.msra.mxu0 0
      %1454 = vmatprep.mubr.bf16.mxu0 0
      %1455 = vmatmul.mubr.bf16.gmra.mxu0 %v1420
      %v1456 = vpop.f32.mrf.mxu0
      %v1457 = vadd.f32 %v1393, %v1456
      %v1458 = vpop.f32.mrf.mxu0
      %v1459 = vpop.f32.mrf.mxu0
      %v1460 = vadd.f32 %v1393, %v1459
      %v1461 = vpop.f32.mrf.mxu0
      %1462 = vdwg.mxu0
      %v1463 = vadd.f32 %v1274, %v1457
      %v1464 = vadd.f32 %v1275, %v1460
      %p1465 = scmp.lt.s32.totalorder %s22, 1
      // Predicated region
      $region49: #{encoder_forward.3} parent=43 // pred_check
        %p1466 = pneg %p1465
      $region50: #{encoder_forward.3} parent=43 // pred_check_branch
        %1468 = sbr.rel (%p1466) target = $region52
      $region51: #{encoder_forward.3} parent=43 // pred_region
        %1469 = vst.msk [vmem:[#allocation2] sm:$0xff] %vm393, %v1463
        %1470 = vst.msk [vmem:[#allocation2 + $0x8] sm:$0xff] %vm393, %v1464
      $region52: #{encoder_forward.3} parent=43 // pred_fallthru
        _
      %p1471 = scmp.eq.s32.totalorder %s22, 1
      // Predicated region
      $region53: #{encoder_forward.3} parent=43 // pred_check
        %p1472 = pneg %p1471
      $region54: #{encoder_forward.3} parent=43 // pred_check_branch
        %1474 = sbr.rel (%p1472) target = $region56
      $region55: #{encoder_forward.3} parent=43 // pred_region
        %1475 = vst.msk [vmem:[%s362] sm:$0xff] %vm393, %v1463
        %1476 = vst.msk [vmem:[%s362 + $0x8] sm:$0xff] %vm393, %v1464
      $region56: #{encoder_forward.3} parent=43 // pred_fallthru
        _
      %s1477 = smul.u32 2, %s21
      %p1478 = scmp.lt.s32.totalorder %s1477, 1
      %s1479 = scalar_select %p1478, %s1477, 1
      %s1480 = smul.addr %s1479, 8
      %s1481 = scalar_lea.vmem %s6, %s1480
      // Predicated region
      $region57: #{encoder_forward.3} parent=43 // pred_check
        %p1482 = pneg %p203
      $region58: #{encoder_forward.3} parent=43 // pred_check_branch
        %1484 = sbr.rel (%p1482) target = $region60
      $region59: #{encoder_forward.3} parent=43 // pred_region
        %s1485 = smul.u32 2, %s21
      $region60: #{encoder_forward.3} parent=43 // pred_fallthru
        _
      // Predicated region
      $region61: #{encoder_forward.3} parent=43 // pred_check
        %p1486 = pneg %p203
      $region62: #{encoder_forward.3} parent=43 // pred_check_branch
        %1488 = sbr.rel (%p1486) target = $region64
      $region63: #{encoder_forward.3} parent=43 // pred_region
        %s1489 = smul.u32 2, %s21
        %p1490 = scmp.lt.s32.totalorder %s1489, 1
        %s1491 = scalar_select %p1490, %s1489, 1
        %s1492 = smul.addr %s1491, 8
        %s1493 = scalar_lea.vmem %s6, %s1492
      $region64: #{encoder_forward.3} parent=43 // pred_fallthru
        _
    $region44: #{encoder_forward.3} parent=5 // pred_fallthru
      _
    %p1494 = scmp.le.s32.totalorder 2, %s12
    // Predicated region
    $region65: #{encoder_forward.3} parent=5 // pred_check
      %p1495 = pneg %p1494
    $region66: #{encoder_forward.3} parent=5 // pred_check_branch
      %1497 = sbr.rel (%p1495) target = $region68
    $region67: #{encoder_forward.3} parent=5 // pred_region
      %s1498 = ssub.s32 %s12, 2
    $region68: #{encoder_forward.3} parent=5 // pred_fallthru
      _
  $region6: #{encoder_forward.3} parent=0 // loop_footer
    %s16 = sadd.s32 1, %s12
  $region7: #{encoder_forward.3} parent=0 // loop_footer_branch
    %11 = sbr.rel target = $region3
  $region8: #{encoder_forward.3} parent=0 // loop_exit
    _

</llo_original>
